<compile_context>
chip_gen: v7x
topology: tpu7x:2x2x1
jax: 0.10.0
libtpu: 0.0.40
codegen_flags: <defaults>
</compile_context>

<pallas_src>
import jax
import jax.numpy as jnp
from jax.experimental import pallas as pl
from jax.experimental.pallas import tpu as pltpu

_EPS = 1e-5  # nn.BatchNorm2d default


def _round_up(v, m):
    return ((v + m - 1) // m) * m


# ---------------------------------------------------------------------------
# stage 1: conv_1 (+ conv_3 shortcut) pre-BN, plus per-image BN partial sums
# ---------------------------------------------------------------------------
def _make_stage1_kernel(KH, KW, stride, Ho, Wo, Cin, Cp, use_proj):
    R = Ho * Wo
    K1 = KH * KW * Cin
    pad = KH // 2
    n_phase = stride * stride

    def kernel(*refs):
        idx = 0
        phase_refs = refs[idx:idx + n_phase]; idx += n_phase
        w1_ref = refs[idx]; idx += 1
        w3_ref = None
        if use_proj:
            w3_ref = refs[idx]; idx += 1
        y1_ref = refs[idx]; idx += 1
        y3_ref = refs[idx]; idx += 1
        st1_ref = refs[idx]; idx += 1
        st3_ref = refs[idx] if use_proj else None

        # im2col of conv_1: stride-s subsampling was pre-resolved by the phase
        # split, so every tap is a plain contiguous slice of an in-VMEM block.
        taps = []
        for kh in range(KH):
            a, i0 = kh % stride, kh // stride
            for kw in range(KW):
                b, j0 = kw % stride, kw // stride
                taps.append(phase_refs[a * stride + b][i0:i0 + Ho, j0:j0 + Wo, :])
        patch = jnp.concatenate(taps, axis=-1).reshape(R, K1)           # bf16

        # conv_1 as ONE wide-K MXU matmul, f32 accumulation (bias dropped: it is
        # cancelled exactly by BN's mean subtraction).
        y1 = jnp.dot(patch, w1_ref[...], preferred_element_type=jnp.float32)
        y1_ref[...] = y1
        st1_ref[...] = jnp.concatenate(
            [jnp.sum(y1, axis=0, keepdims=True),
             jnp.sum(y1 * y1, axis=0, keepdims=True)], axis=0)

        # shortcut input: the centre tap of x_pad IS x[::stride, ::stride].
        xs = taps[pad * KW + pad].reshape(R, Cin)
        if use_proj:
            y3 = jnp.dot(xs, w3_ref[...], preferred_element_type=jnp.float32)
            y3_ref[...] = y3
            st3_ref[...] = jnp.concatenate(
                [jnp.sum(y3, axis=0, keepdims=True),
                 jnp.sum(y3 * y3, axis=0, keepdims=True)], axis=0)
        else:
            # identity shortcut (stride==1, Cin==Cout): just channel-pad to Cp.
            y3_ref[...] = jnp.pad(xs.astype(jnp.float32),
                                  ((0, 0), (0, Cp - Cin)))

    return kernel


# ---------------------------------------------------------------------------
# stage 2: folded bn_1 + relu + conv_2 pre-BN, plus per-image BN partial sums
# ---------------------------------------------------------------------------
def _make_stage2_kernel(KH, KW, Ho, Wo, Cp):
    R = Ho * Wo
    ph, pw = KH // 2, KW // 2
    K2 = KH * KW * Cp

    def kernel(y1_ref, sc1_ref, sh1_ref, w2_ref, y2_ref, st2_ref):
        # bn_1 folded into a per-channel affine; BN math in f32, MXU input bf16.
        h1 = jnp.maximum(y1_ref[...] * sc1_ref[...] + sh1_ref[...], 0.0)
        h1 = h1.astype(jnp.bfloat16).reshape(Ho, Wo, Cp)
        # halo handled by padding the in-register tile (border zeros only).
        h1p = jnp.pad(h1, ((ph, ph), (pw, pw), (0, 0)))
        taps = [h1p[kh:kh + Ho, kw:kw + Wo, :]
                for kh in range(KH) for kw in range(KW)]
        patch = jnp.concatenate(taps, axis=-1).reshape(R, K2)           # bf16

        y2 = jnp.dot(patch, w2_ref[...], preferred_element_type=jnp.float32)
        y2_ref[...] = y2
        st2_ref[...] = jnp.concatenate(
            [jnp.sum(y2, axis=0, keepdims=True),
             jnp.sum(y2 * y2, axis=0, keepdims=True)], axis=0)

    return kernel


# ---------------------------------------------------------------------------
# stage 3: folded bn_2 / bn_3 + residual add + relu
# ---------------------------------------------------------------------------
def _stage3_kernel(y2_ref, y3_ref, sc2_ref, sh2_ref, sc3_ref, sh3_ref, o_ref):
    main = y2_ref[...] * sc2_ref[...] + sh2_ref[...]
    sc = y3_ref[...] * sc3_ref[...] + sh3_ref[...]
    o_ref[...] = jnp.maximum(main + sc, 0.0)


# ---------------------------------------------------------------------------
# wrapper
# ---------------------------------------------------------------------------
def res2d_forward(x, params, *, shape=3, stride=2):
    """x: (N, H, W, Cin) float32, NHWC layout."""
    N, H, W, Cin = x.shape
    KH = KW = shape
    Cout = params["w1"].shape[-1]
    pad = shape // 2
    Ho = (H + 2 * pad - KH) // stride + 1
    Wo = (W + 2 * pad - KW) // stride + 1
    use_proj = (stride != 1) or (Cin != Cout)

    Cp = _round_up(Cout, 128)          # lane-dense channel padding
    R = Ho * Wo
    Rtot = N * R
    K1 = KH * KW * Cin
    K2 = KH * KW * Cp
    Hp, Wp = H + 2 * pad, W + 2 * pad
    f32, bf16 = jnp.float32, jnp.bfloat16

    # ---- layout plumbing only (no duplication): pad + phase-split x so every
    # conv_1 tap is a contiguous slice inside the kernel.
    x_pad = jnp.pad(x.astype(bf16), ((0, 0), (pad, pad), (pad, pad), (0, 0)))
    phases = [x_pad[:, a::stride, b::stride, :]
              for a in range(stride) for b in range(stride)]

    # ---- weights: HWIO -> (K, Cp), zero-padded output (and input for conv_2)
    # channels, bf16 for the MXU.
    def pad_axis(v, axis, to):
        padw = [(0, 0)] * v.ndim
        padw[axis] = (0, to - v.shape[axis])
        return jnp.pad(v, padw)

    w1 = pad_axis(params["w1"], 3, Cp).reshape(K1, Cp).astype(bf16)
    w2 = pad_axis(pad_axis(params["w2"], 2, Cp), 3, Cp).reshape(K2, Cp).astype(bf16)

    def vecp(v):
        return pad_axis(v.astype(f32), 0, Cp)

    g1, be1 = vecp(params["g1"]), vecp(params["be1"])
    g2, be2 = vecp(params["g2"]), vecp(params["be2"])

    def img_spec(shp):                       # batch dim squeezed, rest full
        return pl.BlockSpec((None,) + tuple(shp),
                            lambda n: (n,) + (0,) * len(shp))

    def full_spec(shp):                      # loaded once (constant index map)
        nd = len(shp)
        return pl.BlockSpec(tuple(shp), lambda n: (0,) * nd)

    cparams = pltpu.CompilerParams(
        dimension_semantics=("parallel",),
        vmem_limit_bytes=48 * 1024 * 1024)

    # ---------------- stage 1 ----------------
    k1 = _make_stage1_kernel(KH, KW, stride, Ho, Wo, Cin, Cp, use_proj)
    in1 = list(phases) + [w1]
    in1_specs = [img_spec(p.shape[1:]) for p in phases] + [full_spec(w1.shape)]
    if use_proj:
        w3 = pad_axis(params["w3"].reshape(Cin, Cout), 1, Cp).astype(bf16)
        in1.append(w3)
        in1_specs.append(full_spec(w3.shape))
    out1_shapes = [jax.ShapeDtypeStruct((N, R, Cp), f32),
                   jax.ShapeDtypeStruct((N, R, Cp), f32),
                   jax.ShapeDtypeStruct((N, 2, Cp), f32)]
    out1_specs = [img_spec((R, Cp)), img_spec((R, Cp)), img_spec((2, Cp))]
    if use_proj:
        out1_shapes.append(jax.ShapeDtypeStruct((N, 2, Cp), f32))
        out1_specs.append(img_spec((2, Cp)))

    flops1 = int(2 * Rtot * K1 * Cp + (2 * Rtot * Cin * Cp if use_proj else 0))
    bytes1 = int(2 * N * Hp * Wp * Cin + 2 * K1 * Cp
                 + (2 * Cin * Cp if use_proj else 0)
                 + 4 * 2 * Rtot * Cp + 4 * 4 * N * Cp)
    res1 = pl.pallas_call(
        k1, grid=(N,),
        out_shape=tuple(out1_shapes),
        in_specs=in1_specs, out_specs=tuple(out1_specs),
        compiler_params=cparams,
        cost_estimate=pl.CostEstimate(flops=flops1, transcendentals=0,
                                      bytes_accessed=bytes1),
    )(*in1)
    if use_proj:
        y1, y3, st1, st3 = res1
    else:
        y1, y3, st1 = res1

    # tiny per-channel glue: combine per-image partial sums, fold BN -> affine.
    def fold_bn(st, gamma, beta):
        s = jnp.sum(st, axis=0)                      # (2, Cp)
        mean = s[0] / Rtot
        var = jnp.maximum(s[1] / Rtot - mean * mean, 0.0)   # biased variance
        scale = gamma * jax.lax.rsqrt(var + _EPS)
        shift = beta - mean * scale
        return scale.reshape(1, Cp), shift.reshape(1, Cp)

    sc1, sh1 = fold_bn(st1, g1, be1)

    # ---------------- stage 2 ----------------
    k2 = _make_stage2_kernel(KH, KW, Ho, Wo, Cp)
    flops2 = int(2 * Rtot * K2 * Cp)
    bytes2 = int(4 * 2 * Rtot * Cp + 2 * K2 * Cp + 4 * 2 * N * Cp + 4 * 4 * Cp)
    y2, st2 = pl.pallas_call(
        k2, grid=(N,),
        out_shape=(jax.ShapeDtypeStruct((N, R, Cp), f32),
                   jax.ShapeDtypeStruct((N, 2, Cp), f32)),
        in_specs=[img_spec((R, Cp)), full_spec((1, Cp)), full_spec((1, Cp)),
                  full_spec(w2.shape)],
        out_specs=(img_spec((R, Cp)), img_spec((2, Cp))),
        compiler_params=cparams,
        cost_estimate=pl.CostEstimate(flops=flops2, transcendentals=0,
                                      bytes_accessed=bytes2),
    )(y1, sc1, sh1, w2)

    sc2, sh2 = fold_bn(st2, g2, be2)
    if use_proj:
        g3, be3 = vecp(params["g3"]), vecp(params["be3"])
        sc3, sh3 = fold_bn(st3, g3, be3)
    else:
        sc3 = jnp.ones((1, Cp), f32)
        sh3 = jnp.zeros((1, Cp), f32)

    # ---------------- stage 3 ----------------
    out = pl.pallas_call(
        _stage3_kernel, grid=(N,),
        out_shape=jax.ShapeDtypeStruct((N, R, Cp), f32),
        in_specs=[img_spec((R, Cp)), img_spec((R, Cp)),
                  full_spec((1, Cp)), full_spec((1, Cp)),
                  full_spec((1, Cp)), full_spec((1, Cp))],
        out_specs=img_spec((R, Cp)),
        compiler_params=cparams,
        cost_estimate=pl.CostEstimate(flops=int(4 * Rtot * Cp), transcendentals=0,
                                      bytes_accessed=int(4 * 3 * Rtot * Cp)),
    )(y2, y3, sc2, sh2, sc3, sh3)

    # drop the zero-padded channels, restore NHWC.
    return out.reshape(N, Ho, Wo, Cp)[..., :Cout]


# ---------------------------------------------------------------------------
# params + reference
# ---------------------------------------------------------------------------
def init_params(key, Cin, Cout, *, shape=3, stride=2):
    use_proj = (stride != 1) or (Cin != Cout)
    keys = jax.random.split(key, 12)

    def conv_w(k, kh, kw, ci, co):
        fan_in = ci * kh * kw
        return jax.random.normal(k, (kh, kw, ci, co), jnp.float32) / (fan_in ** 0.5)

    p = {
        "w1": conv_w(keys[0], shape, shape, Cin, Cout),
        "b1": 0.1 * jax.random.normal(keys[1], (Cout,), jnp.float32),
        "g1": 1.0 + 0.1 * jax.random.normal(keys[2], (Cout,), jnp.float32),
        "be1": 0.1 * jax.random.normal(keys[3], (Cout,), jnp.float32),
        "w2": conv_w(keys[4], shape, shape, Cout, Cout),
        "b2": 0.1 * jax.random.normal(keys[5], (Cout,), jnp.float32),
        "g2": 1.0 + 0.1 * jax.random.normal(keys[6], (Cout,), jnp.float32),
        "be2": 0.1 * jax.random.normal(keys[7], (Cout,), jnp.float32),
    }
    if use_proj:
        p.update({
            "w3": conv_w(keys[8], 1, 1, Cin, Cout),
            "b3": 0.1 * jax.random.normal(keys[9], (Cout,), jnp.float32),
            "g3": 1.0 + 0.1 * jax.random.normal(keys[10], (Cout,), jnp.float32),
            "be3": 0.1 * jax.random.normal(keys[11], (Cout,), jnp.float32),
        })
    return p


def res2d_reference(x, params, *, shape=3, stride=2, eps=_EPS,
                    conv_dtype=jnp.float32):
    """Pure-JAX reference of the PyTorch forward (NHWC, training-mode BN).

    conv_dtype=bfloat16 mirrors the kernel's MXU quantization points (inputs and
    weights of every conv in bf16, f32 accumulation).  Conv biases ARE applied
    here, demonstrating that dropping them before BN in the kernel is exact.
    """
    pad = shape // 2

    def conv(inp, w, b, s, p):
        y = jax.lax.conv_general_dilated(
            inp.astype(conv_dtype), w.astype(conv_dtype), (s, s),
            [(p, p), (p, p)], dimension_numbers=("NHWC", "HWIO", "NHWC"),
            preferred_element_type=jnp.float32)
        return y + b.reshape(1, 1, 1, -1)

    def bn(y, g, be):
        m = jnp.mean(y, axis=(0, 1, 2), keepdims=True)
        v = jnp.mean((y - m) ** 2, axis=(0, 1, 2), keepdims=True)
        return ((y - m) * jax.lax.rsqrt(v + eps) * g.reshape(1, 1, 1, -1)
                + be.reshape(1, 1, 1, -1))

    h = jax.nn.relu(bn(conv(x, params["w1"], params["b1"], stride, pad),
                       params["g1"], params["be1"]))
    out = bn(conv(h, params["w2"], params["b2"], 1, pad),
             params["g2"], params["be2"])
    Cin, Cout = x.shape[-1], params["w1"].shape[-1]
    if stride != 1 or Cin != Cout:
        sc = bn(conv(x, params["w3"], params["b3"], stride, 0),
                params["g3"], params["be3"])
    else:
        sc = x
    return jax.nn.relu(out + sc)


if __name__ == "__main__":
    key = jax.random.PRNGKey(0)
    kx, kp = jax.random.split(key)
    N, Cin, H, W, Cout = 2, 4, 16, 16, 8

    # PyTorch-style NCHW input, transposed to the kernel's NHWC layout.
    x_nchw = jax.random.normal(kx, (N, Cin, H, W), jnp.float32)
    x = jnp.transpose(x_nchw, (0, 2, 3, 1))
    params = init_params(kp, Cin, Cout, shape=3, stride=2)

    y = res2d_forward(x, params, shape=3, stride=2)
    y = jax.block_until_ready(y)
    assert y.shape == (N, 8, 8, Cout), y.shape

    # primary check: reference with matching bf16 conv inputs (tight tolerance)
    y_ref_bf = res2d_reference(x, params, shape=3, stride=2,
                               conv_dtype=jnp.bfloat16)
    err_bf = float(jnp.max(jnp.abs(y - y_ref_bf)))
    if err_bf > 5e-3:
        raise AssertionError(f"kernel vs bf16-matched reference: {err_bf}")

    # sanity check: full-f32 reference (loose tolerance for bf16 quantization)
    y_ref_f32 = res2d_reference(x, params, shape=3, stride=2,
                                conv_dtype=jnp.float32)
    err_f32 = float(jnp.max(jnp.abs(y - y_ref_f32)))
    if err_f32 > 1e-1:
        raise AssertionError(f"kernel vs f32 reference: {err_f32}")

    print("KERNEL_OK")
</pallas_src>

<mosaic_0001>
module attributes {stable_mosaic.version = 11 : i64} {
  func.func @kernel(%arg0: i32, %arg1: memref<1x9x9x4xbf16, #tpu.memory_space<vmem>>, %arg2: memref<1x9x9x4xbf16, #tpu.memory_space<vmem>>, %arg3: memref<1x9x9x4xbf16, #tpu.memory_space<vmem>>, %arg4: memref<1x9x9x4xbf16, #tpu.memory_space<vmem>>, %arg5: memref<36x128xbf16, #tpu.memory_space<vmem>>, %arg6: memref<4x128xbf16, #tpu.memory_space<vmem>>, %arg7: memref<1x64x128xf32, #tpu.memory_space<vmem>>, %arg8: memref<1x64x128xf32, #tpu.memory_space<vmem>>, %arg9: memref<1x2x128xf32, #tpu.memory_space<vmem>>, %arg10: memref<1x2x128xf32, #tpu.memory_space<vmem>>) attributes {dimension_semantics = [#tpu.dimension_semantics<parallel>], iteration_bounds = array<i64: 2>, scalar_prefetch = 0 : i64, scratch_operands = 0 : i64, tpu.core_type = #tpu.core_type<tc>, window_params = [{transform_indices = @transform_0, window_bounds = array<i64: 1, 9, 9, 4>}, {transform_indices = @transform_1, window_bounds = array<i64: 1, 9, 9, 4>}, {transform_indices = @transform_2, window_bounds = array<i64: 1, 9, 9, 4>}, {transform_indices = @transform_3, window_bounds = array<i64: 1, 9, 9, 4>}, {pipeline_mode = #tpu.pipeline_mode<synchronous>, transform_indices = @transform_4, window_bounds = array<i64: 36, 128>}, {pipeline_mode = #tpu.pipeline_mode<synchronous>, transform_indices = @transform_5, window_bounds = array<i64: 4, 128>}, {transform_indices = @transform_6, window_bounds = array<i64: 1, 64, 128>}, {transform_indices = @transform_7, window_bounds = array<i64: 1, 64, 128>}, {transform_indices = @transform_8, window_bounds = array<i64: 1, 2, 128>}, {transform_indices = @transform_9, window_bounds = array<i64: 1, 2, 128>}]} {
    %c0 = arith.constant 0 : index
    %c0_0 = arith.constant 0 : index
    %c0_1 = arith.constant 0 : index
    %c0_2 = arith.constant 0 : index
    %0 = vector.load %arg1[%c0, %c0_0, %c0_1, %c0_2] : memref<1x9x9x4xbf16, #tpu.memory_space<vmem>>, vector<1x8x8x4xbf16>
    %1 = vector.shape_cast %0 : vector<1x8x8x4xbf16> to vector<8x8x4xbf16>
    %c0_3 = arith.constant 0 : index
    %c0_4 = arith.constant 0 : index
    %c0_5 = arith.constant 0 : index
    %c0_6 = arith.constant 0 : index
    %2 = vector.load %arg2[%c0_3, %c0_4, %c0_5, %c0_6] : memref<1x9x9x4xbf16, #tpu.memory_space<vmem>>, vector<1x8x8x4xbf16>
    %3 = vector.shape_cast %2 : vector<1x8x8x4xbf16> to vector<8x8x4xbf16>
    %c0_7 = arith.constant 0 : index
    %c0_8 = arith.constant 0 : index
    %c1 = arith.constant 1 : index
    %c0_9 = arith.constant 0 : index
    %4 = vector.load %arg1[%c0_7, %c0_8, %c1, %c0_9] : memref<1x9x9x4xbf16, #tpu.memory_space<vmem>>, vector<1x8x8x4xbf16>
    %5 = vector.shape_cast %4 : vector<1x8x8x4xbf16> to vector<8x8x4xbf16>
    %c0_10 = arith.constant 0 : index
    %c0_11 = arith.constant 0 : index
    %c0_12 = arith.constant 0 : index
    %c0_13 = arith.constant 0 : index
    %6 = vector.load %arg3[%c0_10, %c0_11, %c0_12, %c0_13] : memref<1x9x9x4xbf16, #tpu.memory_space<vmem>>, vector<1x8x8x4xbf16>
    %7 = vector.shape_cast %6 : vector<1x8x8x4xbf16> to vector<8x8x4xbf16>
    %c0_14 = arith.constant 0 : index
    %c0_15 = arith.constant 0 : index
    %c0_16 = arith.constant 0 : index
    %c0_17 = arith.constant 0 : index
    %8 = vector.load %arg4[%c0_14, %c0_15, %c0_16, %c0_17] : memref<1x9x9x4xbf16, #tpu.memory_space<vmem>>, vector<1x8x8x4xbf16>
    %9 = vector.shape_cast %8 : vector<1x8x8x4xbf16> to vector<8x8x4xbf16>
    %c0_18 = arith.constant 0 : index
    %c0_19 = arith.constant 0 : index
    %c1_20 = arith.constant 1 : index
    %c0_21 = arith.constant 0 : index
    %10 = vector.load %arg3[%c0_18, %c0_19, %c1_20, %c0_21] : memref<1x9x9x4xbf16, #tpu.memory_space<vmem>>, vector<1x8x8x4xbf16>
    %11 = vector.shape_cast %10 : vector<1x8x8x4xbf16> to vector<8x8x4xbf16>
    %c0_22 = arith.constant 0 : index
    %c1_23 = arith.constant 1 : index
    %c0_24 = arith.constant 0 : index
    %c0_25 = arith.constant 0 : index
    %12 = vector.load %arg1[%c0_22, %c1_23, %c0_24, %c0_25] : memref<1x9x9x4xbf16, #tpu.memory_space<vmem>>, vector<1x8x8x4xbf16>
    %13 = vector.shape_cast %12 : vector<1x8x8x4xbf16> to vector<8x8x4xbf16>
    %c0_26 = arith.constant 0 : index
    %c1_27 = arith.constant 1 : index
    %c0_28 = arith.constant 0 : index
    %c0_29 = arith.constant 0 : index
    %14 = vector.load %arg2[%c0_26, %c1_27, %c0_28, %c0_29] : memref<1x9x9x4xbf16, #tpu.memory_space<vmem>>, vector<1x8x8x4xbf16>
    %15 = vector.shape_cast %14 : vector<1x8x8x4xbf16> to vector<8x8x4xbf16>
    %c0_30 = arith.constant 0 : index
    %c1_31 = arith.constant 1 : index
    %c1_32 = arith.constant 1 : index
    %c0_33 = arith.constant 0 : index
    %16 = vector.load %arg1[%c0_30, %c1_31, %c1_32, %c0_33] : memref<1x9x9x4xbf16, #tpu.memory_space<vmem>>, vector<1x8x8x4xbf16>
    %17 = vector.shape_cast %16 : vector<1x8x8x4xbf16> to vector<8x8x4xbf16>
    %18 = tpu.concatenate %1, %3, %5, %7, %9, %11, %13, %15, %17 in 2 : vector<8x8x4xbf16>, vector<8x8x4xbf16>, vector<8x8x4xbf16>, vector<8x8x4xbf16>, vector<8x8x4xbf16>, vector<8x8x4xbf16>, vector<8x8x4xbf16>, vector<8x8x4xbf16>, vector<8x8x4xbf16> -> vector<8x8x36xbf16>
    %19 = vector.shape_cast %18 : vector<8x8x36xbf16> to vector<64x36xbf16>
    %c0_34 = arith.constant 0 : index
    %c0_35 = arith.constant 0 : index
    %20 = vector.load %arg5[%c0_34, %c0_35] : memref<36x128xbf16, #tpu.memory_space<vmem>>, vector<36x128xbf16>
    %cst = arith.constant dense<0.000000e+00> : vector<64x128xf32>
    %21 = tpu.matmul %19, %20, %cst {dimension_numbers = #tpu.dot_dimension_numbers<[1], [0], [0], [1], [0, 0, 1, 1], [], []>} : vector<64x36xbf16>, vector<36x128xbf16>, vector<64x128xf32> -> vector<64x128xf32>
    %c0_36 = arith.constant 0 : index
    %c0_37 = arith.constant 0 : index
    %c0_38 = arith.constant 0 : index
    %22 = vector.load %arg7[%c0_36, %c0_37, %c0_38] : memref<1x64x128xf32, #tpu.memory_space<vmem>>, vector<1x64x128xf32>
    %23 = vector.shape_cast %22 : vector<1x64x128xf32> to vector<64x128xf32>
    %24 = vector.shape_cast %21 : vector<64x128xf32> to vector<1x64x128xf32>
    tpu.vector_store %arg7[%c0_36, %c0_37, %c0_38], %24 {strides = array<i32>} : memref<1x64x128xf32, #tpu.memory_space<vmem>>, vector<1x64x128xf32>,
    %cst_39 = arith.constant dense<0.000000e+00> : vector<128xf32>
    %25 = vector.multi_reduction <add>, %21, %cst_39 [0] : vector<64x128xf32> to vector<128xf32>
    %26 = vector.shape_cast %25 : vector<128xf32> to vector<1x128xf32>
    %27 = arith.mulf %21, %21 : vector<64x128xf32>
    %cst_40 = arith.constant dense<0.000000e+00> : vector<128xf32>
    %28 = vector.multi_reduction <add>, %27, %cst_40 [0] : vector<64x128xf32> to vector<128xf32>
    %29 = vector.shape_cast %28 : vector<128xf32> to vector<1x128xf32>
    %30 = tpu.concatenate %26, %29 in 0 : vector<1x128xf32>, vector<1x128xf32> -> vector<2x128xf32>
    %c0_41 = arith.constant 0 : index
    %c0_42 = arith.constant 0 : index
    %c0_43 = arith.constant 0 : index
    %31 = vector.load %arg9[%c0_41, %c0_42, %c0_43] : memref<1x2x128xf32, #tpu.memory_space<vmem>>, vector<1x2x128xf32>
    %32 = vector.shape_cast %31 : vector<1x2x128xf32> to vector<2x128xf32>
    %33 = vector.shape_cast %30 : vector<2x128xf32> to vector<1x2x128xf32>
    tpu.vector_store %arg9[%c0_41, %c0_42, %c0_43], %33 {strides = array<i32>} : memref<1x2x128xf32, #tpu.memory_space<vmem>>, vector<1x2x128xf32>,
    %34 = vector.shape_cast %9 : vector<8x8x4xbf16> to vector<64x4xbf16>
    %c0_44 = arith.constant 0 : index
    %c0_45 = arith.constant 0 : index
    %35 = vector.load %arg6[%c0_44, %c0_45] : memref<4x128xbf16, #tpu.memory_space<vmem>>, vector<4x128xbf16>
    %cst_46 = arith.constant dense<0.000000e+00> : vector<64x128xf32>
    %36 = tpu.matmul %34, %35, %cst_46 {dimension_numbers = #tpu.dot_dimension_numbers<[1], [0], [0], [1], [0, 0, 1, 1], [], []>} : vector<64x4xbf16>, vector<4x128xbf16>, vector<64x128xf32> -> vector<64x128xf32>
    %c0_47 = arith.constant 0 : index
    %c0_48 = arith.constant 0 : index
    %c0_49 = arith.constant 0 : index
    %37 = vector.load %arg8[%c0_47, %c0_48, %c0_49] : memref<1x64x128xf32, #tpu.memory_space<vmem>>, vector<1x64x128xf32>
    %38 = vector.shape_cast %37 : vector<1x64x128xf32> to vector<64x128xf32>
    %39 = vector.shape_cast %36 : vector<64x128xf32> to vector<1x64x128xf32>
    tpu.vector_store %arg8[%c0_47, %c0_48, %c0_49], %39 {strides = array<i32>} : memref<1x64x128xf32, #tpu.memory_space<vmem>>, vector<1x64x128xf32>,
    %cst_50 = arith.constant dense<0.000000e+00> : vector<128xf32>
    %40 = vector.multi_reduction <add>, %36, %cst_50 [0] : vector<64x128xf32> to vector<128xf32>
    %41 = vector.shape_cast %40 : vector<128xf32> to vector<1x128xf32>
    %42 = arith.mulf %36, %36 : vector<64x128xf32>
    %cst_51 = arith.constant dense<0.000000e+00> : vector<128xf32>
    %43 = vector.multi_reduction <add>, %42, %cst_51 [0] : vector<64x128xf32> to vector<128xf32>
    %44 = vector.shape_cast %43 : vector<128xf32> to vector<1x128xf32>
    %45 = tpu.concatenate %41, %44 in 0 : vector<1x128xf32>, vector<1x128xf32> -> vector<2x128xf32>
    %c0_52 = arith.constant 0 : index
    %c0_53 = arith.constant 0 : index
    %c0_54 = arith.constant 0 : index
    %46 = vector.load %arg10[%c0_52, %c0_53, %c0_54] : memref<1x2x128xf32, #tpu.memory_space<vmem>>, vector<1x2x128xf32>
    %47 = vector.shape_cast %46 : vector<1x2x128xf32> to vector<2x128xf32>
    %48 = vector.shape_cast %45 : vector<2x128xf32> to vector<1x2x128xf32>
    tpu.vector_store %arg10[%c0_52, %c0_53, %c0_54], %48 {strides = array<i32>} : memref<1x2x128xf32, #tpu.memory_space<vmem>>, vector<1x2x128xf32>,
    return
  }
  func.func @transform_0(%arg0: i32) -> (i32, i32, i32, i32) {
    %c0_i32 = arith.constant 0 : i32
    %c0_i32_0 = arith.constant 0 : i32
    %c0_i32_1 = arith.constant 0 : i32
    %c0_i32_2 = arith.constant 0 : i32
    return %arg0, %c0_i32, %c0_i32_0, %c0_i32_1 : i32, i32, i32, i32
  }
  func.func @transform_1(%arg0: i32) -> (i32, i32, i32, i32) {
    %c0_i32 = arith.constant 0 : i32
    %c0_i32_0 = arith.constant 0 : i32
    %c0_i32_1 = arith.constant 0 : i32
    %c0_i32_2 = arith.constant 0 : i32
    return %arg0, %c0_i32, %c0_i32_0, %c0_i32_1 : i32, i32, i32, i32
  }
  func.func @transform_2(%arg0: i32) -> (i32, i32, i32, i32) {
    %c0_i32 = arith.constant 0 : i32
    %c0_i32_0 = arith.constant 0 : i32
    %c0_i32_1 = arith.constant 0 : i32
    %c0_i32_2 = arith.constant 0 : i32
    return %arg0, %c0_i32, %c0_i32_0, %c0_i32_1 : i32, i32, i32, i32
  }
  func.func @transform_3(%arg0: i32) -> (i32, i32, i32, i32) {
    %c0_i32 = arith.constant 0 : i32
    %c0_i32_0 = arith.constant 0 : i32
    %c0_i32_1 = arith.constant 0 : i32
    %c0_i32_2 = arith.constant 0 : i32
    return %arg0, %c0_i32, %c0_i32_0, %c0_i32_1 : i32, i32, i32, i32
  }
  func.func @transform_4(%arg0: i32) -> (i32, i32) {
    %c0_i32 = arith.constant 0 : i32
    %c0_i32_0 = arith.constant 0 : i32
    %c0_i32_1 = arith.constant 0 : i32
    return %c0_i32, %c0_i32_0 : i32, i32
  }
  func.func @transform_5(%arg0: i32) -> (i32, i32) {
    %c0_i32 = arith.constant 0 : i32
    %c0_i32_0 = arith.constant 0 : i32
    %c0_i32_1 = arith.constant 0 : i32
    return %c0_i32, %c0_i32_0 : i32, i32
  }
  func.func @transform_6(%arg0: i32) -> (i32, i32, i32) {
    %c0_i32 = arith.constant 0 : i32
    %c0_i32_0 = arith.constant 0 : i32
    %c0_i32_1 = arith.constant 0 : i32
    return %arg0, %c0_i32, %c0_i32_0 : i32, i32, i32
  }
  func.func @transform_7(%arg0: i32) -> (i32, i32, i32) {
    %c0_i32 = arith.constant 0 : i32
    %c0_i32_0 = arith.constant 0 : i32
    %c0_i32_1 = arith.constant 0 : i32
    return %arg0, %c0_i32, %c0_i32_0 : i32, i32, i32
  }
  func.func @transform_8(%arg0: i32) -> (i32, i32, i32) {
    %c0_i32 = arith.constant 0 : i32
    %c0_i32_0 = arith.constant 0 : i32
    %c0_i32_1 = arith.constant 0 : i32
    return %arg0, %c0_i32, %c0_i32_0 : i32, i32, i32
  }
  func.func @transform_9(%arg0: i32) -> (i32, i32, i32) {
    %c0_i32 = arith.constant 0 : i32
    %c0_i32_0 = arith.constant 0 : i32
    %c0_i32_1 = arith.constant 0 : i32
    return %arg0, %c0_i32, %c0_i32_0 : i32, i32, i32
  }
}

</mosaic_0001>

<llo_original>
// kernel: tpu_custom_call.1
$region0: #{tpu_custom_call.1}
  #allocation0 [shape = 'u32[]', space=smem, size = 0x4, offset = 0x4, fixed_abs, tag = 'smem constant byte address 0x4 - core index']
  #allocation1 [shape = 'u32[144,128]{1,0:T(1,128)}', space=vmem, size = 0x12000, scoped, tag = 'internal scratch']
  %s0 = inlined_call_operand.vmem [shape: bf16[2,9,9,4], index: 0, kind: input, shape index: {}]
  %s1 = inlined_call_operand.vmem [shape: bf16[2,9,9,4], index: 1, kind: input, shape index: {}]
  %s2 = inlined_call_operand.vmem [shape: bf16[2,9,9,4], index: 2, kind: input, shape index: {}]
  %s3 = inlined_call_operand.vmem [shape: bf16[2,9,9,4], index: 3, kind: input, shape index: {}]
  %s4 = inlined_call_operand.vmem [shape: bf16[36,128], index: 4, kind: input, shape index: {}]
  %s5 = inlined_call_operand.vmem [shape: bf16[4,128], index: 5, kind: input, shape index: {}]
  %s6 = inlined_call_operand.hbm [shape: f32[2,64,128], index: 6, kind: output, shape index: {0}]
  %s7 = inlined_call_operand.hbm [shape: f32[2,64,128], index: 7, kind: output, shape index: {1}]
  %s8 = inlined_call_operand.hbm [shape: f32[2,2,128], index: 8, kind: output, shape index: {2}]
  %s9 = inlined_call_operand.hbm [shape: f32[2,2,128], index: 9, kind: output, shape index: {3}]
  %10 = xla_tuple %s6, %s7, %s8, %s9
  %s11 = sld [smem:[#allocation0]]
  $region81: #{tpu_custom_call.1} parent=0
    _
  %s13 = ssub.s32 1, %s11
  %s14 = scalar_select 0, %s13, %s11
  $region1: #{tpu_custom_call.1} parent=0
    #allocation2 [shape = 'u8[65536]{0}', space=vmem, size = 0x10000, scoped, tag = 'output window, operand 0']
    #allocation3 [shape = 's32[2]{0}', space=sflag, size = 0x8, scoped, tag = 'scoped memory for tpu_custom_call.1']
    #allocation4 [shape = 'u8[65536]{0}', space=vmem, size = 0x10000, scoped, tag = 'output window, operand 1']
    #allocation5 [shape = 's32[2]{0}', space=sflag, size = 0x8, scoped, tag = 'scoped memory for tpu_custom_call.1']
    #allocation6 [shape = 'u8[2048]{0}', space=vmem, size = 0x800, scoped, tag = 'output window, operand 2']
    #allocation7 [shape = 'u8[2048]{0}', space=vmem, size = 0x800, scoped, tag = 'output window, operand 3']
    #allocation8 [shape = 's32[2]{0}', space=sflag, size = 0x8, scoped, tag = 'scoped memory for tpu_custom_call.1']
    %15 = vsyncpa [#allocation3], 0
    %s16 = scalar_lea.sflag [#allocation3], 1
    %17 = vsyncpa %s16, 0
    %18 = vsyncpa [#allocation5], 0
    %s19 = scalar_lea.sflag [#allocation5], 1
    %20 = vsyncpa %s19, 0
    %21 = vsyncpa [#allocation8], 0
    %s22 = scalar_lea.sflag [#allocation8], 1
    %23 = vsyncpa %s22, 0
    loop: start=0, step=1, limit=4
    $region2: #{tpu_custom_call.1} parent=1 // loop_pre_header
      _
    $region3: #{tpu_custom_call.1} parent=1 // loop_header
      %s25 = sphi 0, %s29
      %p26 = scmp.ge.s32.totalorder %s25, 4
      %s35 = sphi 0, %s37
      %s38 = sphi 0, %s35
      %s39 = sphi 0, %s38
      %s55 = sphi 0, %s39
      %s61 = sphi 0, %s63
      %s64 = sphi 0, %s61
      %s65 = sphi 0, %s64
      %s81 = sphi 0, %s65
      %s87 = sphi 0, %s89
      %s90 = sphi 0, %s87
      %s91 = sphi 0, %s90
      %s107 = sphi 0, %s91
      %s113 = sphi 0, %s115
      %s116 = sphi 0, %s113
      %s117 = sphi 0, %s116
      %s133 = sphi 0, %s117
      %s137 = sphi 0, %s137
      %s139 = sphi 0, %s137
      %s140 = sphi 0, %s139
      %s154 = sphi 0, %s140
      %s158 = sphi 0, %s158
      %s160 = sphi 0, %s158
      %s161 = sphi 0, %s160
      %s175 = sphi 0, %s161
      %s181 = sphi 0, %s183
      %s184 = sphi 0, %s181
      %s185 = sphi 0, %s184
      %s201 = sphi 0, %s185
      %s207 = sphi 0, %s209
      %s210 = sphi 0, %s207
      %s211 = sphi 0, %s210
      %s227 = sphi 0, %s211
      %s233 = sphi 0, %s235
      %s236 = sphi 0, %s233
      %s237 = sphi 0, %s236
      %s253 = sphi 0, %s237
      %s259 = sphi 0, %s261
      %s262 = sphi 0, %s259
      %s263 = sphi 0, %s262
      %s279 = sphi 0, %s263
    $region4: #{tpu_custom_call.1} parent=1 // loop_header_branch
      %28 = sbr.rel (%p26) target = $region8
    $region5: #{tpu_custom_call.1} parent=1 // loop_body
      %s30 = ssub.s32 %s25, 1
      %s31 = ssub.s32 %s25, 2
      %s32 = sadd.s32 %s25, 1
      %s33 = ssub.s32 %s25, %s32
      %p34 = scmp.eq.s32.totalorder %s33, 0
      %s36 = sadd.s32 %s35, 1
      %s37 = scalar_select %p34, %s35, %s36
      %p40 = pneg %p34
      %p41 = scmp.eq.s32.totalorder %s25, 1
      %p42 = por %p40, %p41
      %p43 = scmp.ne.s32.totalorder %s35, %s38
      %p44 = scmp.eq.s32.totalorder %s25, 0
      %p45 = por %p43, %p44
      %p46 = scmp.ne.s32.totalorder %s35, %s38
      %p47 = scmp.eq.s32.totalorder %s30, 1
      %p48 = por %p46, %p47
      %p49 = scmp.ne.s32.totalorder %s38, %s39
      %p50 = scmp.eq.s32.totalorder %s30, 0
      %p51 = por %p49, %p50
      %p52 = scmp.ne.s32.totalorder %s38, %s39
      %p53 = scmp.eq.s32.totalorder %s31, 1
      %p54 = por %p52, %p53
      %p56 = scmp.ne.s32.totalorder %s39, %s55
      %p57 = scmp.eq.s32.totalorder %s31, 0
      %p58 = por %p56, %p57
      %s59 = ssub.s32 %s25, %s32
      %p60 = scmp.eq.s32.totalorder %s59, 0
      %s62 = sadd.s32 %s61, 1
      %s63 = scalar_select %p60, %s61, %s62
      %p66 = pneg %p60
      %p67 = scmp.eq.s32.totalorder %s25, 1
      %p68 = por %p66, %p67
      %p69 = scmp.ne.s32.totalorder %s61, %s64
      %p70 = scmp.eq.s32.totalorder %s25, 0
      %p71 = por %p69, %p70
      %p72 = scmp.ne.s32.totalorder %s61, %s64
      %p73 = scmp.eq.s32.totalorder %s30, 1
      %p74 = por %p72, %p73
      %p75 = scmp.ne.s32.totalorder %s64, %s65
      %p76 = scmp.eq.s32.totalorder %s30, 0
      %p77 = por %p75, %p76
      %p78 = scmp.ne.s32.totalorder %s64, %s65
      %p79 = scmp.eq.s32.totalorder %s31, 1
      %p80 = por %p78, %p79
      %p82 = scmp.ne.s32.totalorder %s65, %s81
      %p83 = scmp.eq.s32.totalorder %s31, 0
      %p84 = por %p82, %p83
      %s85 = ssub.s32 %s25, %s32
      %p86 = scmp.eq.s32.totalorder %s85, 0
      %s88 = sadd.s32 %s87, 1
      %s89 = scalar_select %p86, %s87, %s88
      %p92 = pneg %p86
      %p93 = scmp.eq.s32.totalorder %s25, 1
      %p94 = por %p92, %p93
      %p95 = scmp.ne.s32.totalorder %s87, %s90
      %p96 = scmp.eq.s32.totalorder %s25, 0
      %p97 = por %p95, %p96
      %p98 = scmp.ne.s32.totalorder %s87, %s90
      %p99 = scmp.eq.s32.totalorder %s30, 1
      %p100 = por %p98, %p99
      %p101 = scmp.ne.s32.totalorder %s90, %s91
      %p102 = scmp.eq.s32.totalorder %s30, 0
      %p103 = por %p101, %p102
      %p104 = scmp.ne.s32.totalorder %s90, %s91
      %p105 = scmp.eq.s32.totalorder %s31, 1
      %p106 = por %p104, %p105
      %p108 = scmp.ne.s32.totalorder %s91, %s107
      %p109 = scmp.eq.s32.totalorder %s31, 0
      %p110 = por %p108, %p109
      %s111 = ssub.s32 %s25, %s32
      %p112 = scmp.eq.s32.totalorder %s111, 0
      %s114 = sadd.s32 %s113, 1
      %s115 = scalar_select %p112, %s113, %s114
      %p118 = pneg %p112
      %p119 = scmp.eq.s32.totalorder %s25, 1
      %p120 = por %p118, %p119
      %p121 = scmp.ne.s32.totalorder %s113, %s116
      %p122 = scmp.eq.s32.totalorder %s25, 0
      %p123 = por %p121, %p122
      %p124 = scmp.ne.s32.totalorder %s113, %s116
      %p125 = scmp.eq.s32.totalorder %s30, 1
      %p126 = por %p124, %p125
      %p127 = scmp.ne.s32.totalorder %s116, %s117
      %p128 = scmp.eq.s32.totalorder %s30, 0
      %p129 = por %p127, %p128
      %p130 = scmp.ne.s32.totalorder %s116, %s117
      %p131 = scmp.eq.s32.totalorder %s31, 1
      %p132 = por %p130, %p131
      %p134 = scmp.ne.s32.totalorder %s117, %s133
      %p135 = scmp.eq.s32.totalorder %s31, 0
      %p136 = por %p134, %p135
      %s138 = sadd.s32 %s137, 1
      %p141 = scmp.eq.s32.totalorder %s25, 1
      %p142 = scmp.ne.s32.totalorder %s137, %s139
      %p143 = scmp.eq.s32.totalorder %s25, 0
      %p144 = por %p142, %p143
      %p145 = scmp.ne.s32.totalorder %s137, %s139
      %p146 = scmp.eq.s32.totalorder %s30, 1
      %p147 = por %p145, %p146
      %p148 = scmp.ne.s32.totalorder %s139, %s140
      %p149 = scmp.eq.s32.totalorder %s30, 0
      %p150 = por %p148, %p149
      %p151 = scmp.ne.s32.totalorder %s139, %s140
      %p152 = scmp.eq.s32.totalorder %s31, 1
      %p153 = por %p151, %p152
      %p155 = scmp.ne.s32.totalorder %s140, %s154
      %p156 = scmp.eq.s32.totalorder %s31, 0
      %p157 = por %p155, %p156
      %s159 = sadd.s32 %s158, 1
      %p162 = scmp.eq.s32.totalorder %s25, 1
      %p163 = scmp.ne.s32.totalorder %s158, %s160
      %p164 = scmp.eq.s32.totalorder %s25, 0
      %p165 = por %p163, %p164
      %p166 = scmp.ne.s32.totalorder %s158, %s160
      %p167 = scmp.eq.s32.totalorder %s30, 1
      %p168 = por %p166, %p167
      %p169 = scmp.ne.s32.totalorder %s160, %s161
      %p170 = scmp.eq.s32.totalorder %s30, 0
      %p171 = por %p169, %p170
      %p172 = scmp.ne.s32.totalorder %s160, %s161
      %p173 = scmp.eq.s32.totalorder %s31, 1
      %p174 = por %p172, %p173
      %p176 = scmp.ne.s32.totalorder %s161, %s175
      %p177 = scmp.eq.s32.totalorder %s31, 0
      %p178 = por %p176, %p177
      %s179 = ssub.s32 %s25, %s32
      %p180 = scmp.eq.s32.totalorder %s179, 0
      %s182 = sadd.s32 %s181, 1
      %s183 = scalar_select %p180, %s181, %s182
      %p186 = pneg %p180
      %p187 = scmp.eq.s32.totalorder %s25, 1
      %p188 = por %p186, %p187
      %p189 = scmp.ne.s32.totalorder %s181, %s184
      %p190 = scmp.eq.s32.totalorder %s25, 0
      %p191 = por %p189, %p190
      %p192 = scmp.ne.s32.totalorder %s181, %s184
      %p193 = scmp.eq.s32.totalorder %s30, 1
      %p194 = por %p192, %p193
      %p195 = scmp.ne.s32.totalorder %s184, %s185
      %p196 = scmp.eq.s32.totalorder %s30, 0
      %p197 = por %p195, %p196
      %p198 = scmp.ne.s32.totalorder %s184, %s185
      %p199 = scmp.eq.s32.totalorder %s31, 1
      %p200 = por %p198, %p199
      %p202 = scmp.ne.s32.totalorder %s185, %s201
      %p203 = scmp.eq.s32.totalorder %s31, 0
      %p204 = por %p202, %p203
      %s205 = ssub.s32 %s25, %s32
      %p206 = scmp.eq.s32.totalorder %s205, 0
      %s208 = sadd.s32 %s207, 1
      %s209 = scalar_select %p206, %s207, %s208
      %p212 = pneg %p206
      %p213 = scmp.eq.s32.totalorder %s25, 1
      %p214 = por %p212, %p213
      %p215 = scmp.ne.s32.totalorder %s207, %s210
      %p216 = scmp.eq.s32.totalorder %s25, 0
      %p217 = por %p215, %p216
      %p218 = scmp.ne.s32.totalorder %s207, %s210
      %p219 = scmp.eq.s32.totalorder %s30, 1
      %p220 = por %p218, %p219
      %p221 = scmp.ne.s32.totalorder %s210, %s211
      %p222 = scmp.eq.s32.totalorder %s30, 0
      %p223 = por %p221, %p222
      %p224 = scmp.ne.s32.totalorder %s210, %s211
      %p225 = scmp.eq.s32.totalorder %s31, 1
      %p226 = por %p224, %p225
      %p228 = scmp.ne.s32.totalorder %s211, %s227
      %p229 = scmp.eq.s32.totalorder %s31, 0
      %p230 = por %p228, %p229
      %s231 = ssub.s32 %s25, %s32
      %p232 = scmp.eq.s32.totalorder %s231, 0
      %s234 = sadd.s32 %s233, 1
      %s235 = scalar_select %p232, %s233, %s234
      %p238 = pneg %p232
      %p239 = scmp.eq.s32.totalorder %s25, 1
      %p240 = por %p238, %p239
      %p241 = scmp.ne.s32.totalorder %s233, %s236
      %p242 = scmp.eq.s32.totalorder %s25, 0
      %p243 = por %p241, %p242
      %p244 = scmp.ne.s32.totalorder %s233, %s236
      %p245 = scmp.eq.s32.totalorder %s30, 1
      %p246 = por %p244, %p245
      %p247 = scmp.ne.s32.totalorder %s236, %s237
      %p248 = scmp.eq.s32.totalorder %s30, 0
      %p249 = por %p247, %p248
      %p250 = scmp.ne.s32.totalorder %s236, %s237
      %p251 = scmp.eq.s32.totalorder %s31, 1
      %p252 = por %p250, %p251
      %p254 = scmp.ne.s32.totalorder %s237, %s253
      %p255 = scmp.eq.s32.totalorder %s31, 0
      %p256 = por %p254, %p255
      %s257 = ssub.s32 %s25, %s32
      %p258 = scmp.eq.s32.totalorder %s257, 0
      %s260 = sadd.s32 %s259, 1
      %s261 = scalar_select %p258, %s259, %s260
      %p264 = pneg %p258
      %p265 = scmp.eq.s32.totalorder %s25, 1
      %p266 = por %p264, %p265
      %p267 = scmp.ne.s32.totalorder %s259, %s262
      %p268 = scmp.eq.s32.totalorder %s25, 0
      %p269 = por %p267, %p268
      %p270 = scmp.ne.s32.totalorder %s259, %s262
      %p271 = scmp.eq.s32.totalorder %s30, 1
      %p272 = por %p270, %p271
      %p273 = scmp.ne.s32.totalorder %s262, %s263
      %p274 = scmp.eq.s32.totalorder %s30, 0
      %p275 = por %p273, %p274
      %p276 = scmp.ne.s32.totalorder %s262, %s263
      %p277 = scmp.eq.s32.totalorder %s31, 1
      %p278 = por %p276, %p277
      %p280 = scmp.ne.s32.totalorder %s263, %s279
      %p281 = scmp.eq.s32.totalorder %s31, 0
      %p282 = por %p280, %p281
      %p283 = scmp.le.s32.totalorder 1, %s25
      %p284 = scmp.lt.s32.totalorder %s25, 3
      %p285 = pnand %p283, %p284
      %p286 = pneg %p285
      // Predicated region
      $region9: #{tpu_custom_call.1} parent=5 // pred_check
        _
      $region10: #{tpu_custom_call.1} parent=5 // pred_check_branch
        %288 = sbr.rel (%p285) target = $region12
      $region11: #{tpu_custom_call.1} parent=5 // pred_region
        %s289 = ssub.s32 %s25, 1
        // Predicated region
        $region13: #{tpu_custom_call.1} parent=11 // pred_check
          %p290 = pneg %p150
        $region14: #{tpu_custom_call.1} parent=11 // pred_check_branch
          %292 = sbr.rel (%p290) target = $region16
        $region15: #{tpu_custom_call.1} parent=11 // pred_region
          _
        $region16: #{tpu_custom_call.1} parent=11 // pred_fallthru
          _
        // Predicated region
        $region17: #{tpu_custom_call.1} parent=11 // pred_check
          %p293 = pneg %p171
        $region18: #{tpu_custom_call.1} parent=11 // pred_check_branch
          %295 = sbr.rel (%p293) target = $region20
        $region19: #{tpu_custom_call.1} parent=11 // pred_region
          _
        $region20: #{tpu_custom_call.1} parent=11 // pred_fallthru
          _
      $region12: #{tpu_custom_call.1} parent=5 // pred_fallthru
        _
      %p296 = scmp.lt.s32.totalorder %s25, 2
      // Predicated region
      $region21: #{tpu_custom_call.1} parent=5 // pred_check
        %p297 = pneg %p296
      $region22: #{tpu_custom_call.1} parent=5 // pred_check_branch
        %299 = sbr.rel (%p297) target = $region24
      $region23: #{tpu_custom_call.1} parent=5 // pred_region
        // Predicated region
        $region25: #{tpu_custom_call.1} parent=23 // pred_check
          %p300 = pneg %p45
        $region26: #{tpu_custom_call.1} parent=23 // pred_check_branch
          %302 = sbr.rel (%p300) target = $region28
        $region27: #{tpu_custom_call.1} parent=23 // pred_region
          %p303 = scmp.lt.s32.totalorder %s25, 1
          %s304 = scalar_select %p303, %s25, 1
          %s305 = smul.addr %s304, 18
          %s306 = smul.addr %s305, 4
          %s307 = scalar_lea.vmem %s0, %s306
        $region28: #{tpu_custom_call.1} parent=23 // pred_fallthru
          _
        // Predicated region
        $region29: #{tpu_custom_call.1} parent=23 // pred_check
          %p308 = pneg %p71
        $region30: #{tpu_custom_call.1} parent=23 // pred_check_branch
          %310 = sbr.rel (%p308) target = $region32
        $region31: #{tpu_custom_call.1} parent=23 // pred_region
          %p311 = scmp.lt.s32.totalorder %s25, 1
          %s312 = scalar_select %p311, %s25, 1
          %s313 = smul.addr %s312, 18
          %s314 = smul.addr %s313, 4
          %s315 = scalar_lea.vmem %s1, %s314
        $region32: #{tpu_custom_call.1} parent=23 // pred_fallthru
          _
        // Predicated region
        $region33: #{tpu_custom_call.1} parent=23 // pred_check
          %p316 = pneg %p97
        $region34: #{tpu_custom_call.1} parent=23 // pred_check_branch
          %318 = sbr.rel (%p316) target = $region36
        $region35: #{tpu_custom_call.1} parent=23 // pred_region
          %p319 = scmp.lt.s32.totalorder %s25, 1
          %s320 = scalar_select %p319, %s25, 1
          %s321 = smul.addr %s320, 18
          %s322 = smul.addr %s321, 4
          %s323 = scalar_lea.vmem %s2, %s322
        $region36: #{tpu_custom_call.1} parent=23 // pred_fallthru
          _
        // Predicated region
        $region37: #{tpu_custom_call.1} parent=23 // pred_check
          %p324 = pneg %p123
        $region38: #{tpu_custom_call.1} parent=23 // pred_check_branch
          %326 = sbr.rel (%p324) target = $region40
        $region39: #{tpu_custom_call.1} parent=23 // pred_region
          %p327 = scmp.lt.s32.totalorder %s25, 1
          %s328 = scalar_select %p327, %s25, 1
          %s329 = smul.addr %s328, 18
          %s330 = smul.addr %s329, 4
          %s331 = scalar_lea.vmem %s3, %s330
        $region40: #{tpu_custom_call.1} parent=23 // pred_fallthru
          _
      $region24: #{tpu_custom_call.1} parent=5 // pred_fallthru
        _
      %p332 = scmp.le.s32.totalorder 1, %s25
      %p333 = scmp.lt.s32.totalorder %s25, 3
      %p334 = pnand %p332, %p333
      %p335 = pneg %p334
      // Predicated region
      $region41: #{tpu_custom_call.1} parent=5 // pred_check
        _
      $region42: #{tpu_custom_call.1} parent=5 // pred_check_branch
        %337 = sbr.rel (%p334) target = $region44
      $region43: #{tpu_custom_call.1} parent=5 // pred_region
        %s338 = ssub.s32 %s25, 1
        %p339 = scmp.lt.s32.totalorder %s30, 1
        %s340 = scalar_select %p339, %s30, 1
        %s341 = smul.addr %s340, 18
        %s342 = smul.addr %s341, 4
        %s343 = scalar_lea.vmem %s0, %s342
        %p344 = pneg %p51
        %p345 = pneg %p48
        %p346 = scmp.lt.s32.totalorder %s30, 1
        %s347 = scalar_select %p346, %s30, 1
        %s348 = smul.addr %s347, 18
        %s349 = smul.addr %s348, 4
        %s350 = scalar_lea.vmem %s1, %s349
        %p351 = pneg %p77
        %p352 = pneg %p74
        %p353 = scmp.lt.s32.totalorder %s30, 1
        %s354 = scalar_select %p353, %s30, 1
        %s355 = smul.addr %s354, 18
        %s356 = smul.addr %s355, 4
        %s357 = scalar_lea.vmem %s2, %s356
        %p358 = pneg %p103
        %p359 = pneg %p100
        %p360 = scmp.lt.s32.totalorder %s30, 1
        %s361 = scalar_select %p360, %s30, 1
        %s362 = smul.addr %s361, 18
        %s363 = smul.addr %s362, 4
        %s364 = scalar_lea.vmem %s3, %s363
        %p365 = pneg %p129
        %p366 = pneg %p126
        %p367 = pneg %p150
        %p368 = pneg %p147
        %p369 = pneg %p171
        %p370 = pneg %p168
        %p371 = pneg %p197
        %p372 = pneg %p194
        %s373 = sand.u32 %s184, 1
        %s374 = scalar_lea.sflag [#allocation3], %s373
        %s375 = sand.u32 %s184, 1
        %s376 = smul.addr %s375, 64
        %s377 = scalar_lea.vmem [#allocation2], %s376
        %p378 = pneg %p223
        %p379 = pneg %p220
        %s380 = sand.u32 %s30, 1
        %s381 = scalar_lea.sflag [#allocation5], %s380
        %s382 = sand.u32 %s210, 1
        %s383 = smul.addr %s382, 64
        %s384 = scalar_lea.vmem [#allocation4], %s383
        %p385 = pneg %p249
        %p386 = pneg %p246
        %s387 = sand.u32 %s30, 1
        %s388 = scalar_lea.sflag [#allocation5], %s387
        %s389 = sand.u32 %s236, 1
        %s390 = smul.addr %s389, 2
        %s391 = scalar_lea.vmem [#allocation6], %s390
        %p392 = pneg %p275
        %p393 = pneg %p272
        %s394 = sand.u32 %s262, 1
        %s395 = scalar_lea.sflag [#allocation8], %s394
        %s396 = sand.u32 %s262, 1
        %s397 = smul.addr %s396, 2
        %s398 = scalar_lea.vmem [#allocation7], %s397
        %p399 = scmp.lt.s32.totalorder %s30, 1
        %s400 = scalar_select %p399, %s30, 1
        %s401 = smul.addr %s400, 18
        %s402 = smul.addr %s401, 4
        %s403 = scalar_lea.vmem %s0, %s402
        %p404 = scmp.lt.s32.totalorder %s30, 1
        %s405 = scalar_select %p404, %s30, 1
        %s406 = smul.addr %s405, 18
        %s407 = smul.addr %s406, 4
        %s408 = scalar_lea.vmem %s1, %s407
        %p409 = scmp.lt.s32.totalorder %s30, 1
        %s410 = scalar_select %p409, %s30, 1
        %s411 = smul.addr %s410, 18
        %s412 = smul.addr %s411, 4
        %s413 = scalar_lea.vmem %s2, %s412
        %p414 = scmp.lt.s32.totalorder %s30, 1
        %s415 = scalar_select %p414, %s30, 1
        %s416 = smul.addr %s415, 18
        %s417 = smul.addr %s416, 4
        %s418 = scalar_lea.vmem %s3, %s417
        %v420 = vld [vmem:[%s403] sm:$0xf]
        %v421 = vld [vmem:[%s403 + $0x8] sm:$0xf]
        %v422 = vld [vmem:[%s403 + $0x10] sm:$0xf]
        %v423 = vld [vmem:[%s403 + $0x18] sm:$0xf]
        %v424 = vld [vmem:[%s403 + $0x20] sm:$0xf]
        %v425 = vld [vmem:[%s403 + $0x28] sm:$0xf]
        %v426 = vld [vmem:[%s403 + $0x30] sm:$0xf]
        %v427 = vld [vmem:[%s403 + $0x38] sm:$0xf]
        %v428 = vld [vmem:[%s408] sm:$0xf]
        %v429 = vld [vmem:[%s408 + $0x8] sm:$0xf]
        %v430 = vld [vmem:[%s408 + $0x10] sm:$0xf]
        %v431 = vld [vmem:[%s408 + $0x18] sm:$0xf]
        %v432 = vld [vmem:[%s408 + $0x20] sm:$0xf]
        %v433 = vld [vmem:[%s408 + $0x28] sm:$0xf]
        %v434 = vld [vmem:[%s408 + $0x30] sm:$0xf]
        %v435 = vld [vmem:[%s408 + $0x38] sm:$0xf]
        %v436 = vld [vmem:[%s403 + $0x4] sm:$0x1]
        %v437 = vld [vmem:[%s403 + $0xc] sm:$0x1]
        %v438 = vld [vmem:[%s403 + $0x14] sm:$0x1]
        %v439 = vld [vmem:[%s403 + $0x1c] sm:$0x1]
        %v440 = vld [vmem:[%s403 + $0x24] sm:$0x1]
        %v441 = vld [vmem:[%s403 + $0x2c] sm:$0x1]
        %v442 = vld [vmem:[%s403 + $0x34] sm:$0x1]
        %v443 = vld [vmem:[%s403 + $0x3c] sm:$0x1]
        %v444 = vld [vmem:[%s413] sm:$0xf]
        %v445 = vld [vmem:[%s413 + $0x8] sm:$0xf]
        %v446 = vld [vmem:[%s413 + $0x10] sm:$0xf]
        %v447 = vld [vmem:[%s413 + $0x18] sm:$0xf]
        %v448 = vld [vmem:[%s413 + $0x20] sm:$0xf]
        %v449 = vld [vmem:[%s413 + $0x28] sm:$0xf]
        %v450 = vld [vmem:[%s413 + $0x30] sm:$0xf]
        %v451 = vld [vmem:[%s413 + $0x38] sm:$0xf]
        %v452 = vld [vmem:[%s418] sm:$0xf]
        %v453 = vld [vmem:[%s418 + $0x8] sm:$0xf]
        %v454 = vld [vmem:[%s418 + $0x10] sm:$0xf]
        %v455 = vld [vmem:[%s418 + $0x18] sm:$0xf]
        %v456 = vld [vmem:[%s418 + $0x20] sm:$0xf]
        %v457 = vld [vmem:[%s418 + $0x28] sm:$0xf]
        %v458 = vld [vmem:[%s418 + $0x30] sm:$0xf]
        %v459 = vld [vmem:[%s418 + $0x38] sm:$0xf]
        %v460 = vld [vmem:[%s413 + $0x4] sm:$0x1]
        %v461 = vld [vmem:[%s413 + $0xc] sm:$0x1]
        %v462 = vld [vmem:[%s413 + $0x14] sm:$0x1]
        %v463 = vld [vmem:[%s413 + $0x1c] sm:$0x1]
        %v464 = vld [vmem:[%s413 + $0x24] sm:$0x1]
        %v465 = vld [vmem:[%s413 + $0x2c] sm:$0x1]
        %v466 = vld [vmem:[%s413 + $0x34] sm:$0x1]
        %v467 = vld [vmem:[%s413 + $0x3c] sm:$0x1]
        %s468 = scalar_lea.vmem %s403, 8
        %v469 = vld [vmem:[%s468] sm:$0xf]
        %v470 = vld [vmem:[%s468 + $0x8] sm:$0xf]
        %v471 = vld [vmem:[%s468 + $0x10] sm:$0xf]
        %v472 = vld [vmem:[%s468 + $0x18] sm:$0xf]
        %v473 = vld [vmem:[%s468 + $0x20] sm:$0xf]
        %v474 = vld [vmem:[%s468 + $0x28] sm:$0xf]
        %v475 = vld [vmem:[%s468 + $0x30] sm:$0xf]
        %v476 = vld [vmem:[%s468 + $0x38] sm:$0xf]
        %s477 = scalar_lea.vmem %s408, 8
        %v478 = vld [vmem:[%s477] sm:$0xf]
        %v479 = vld [vmem:[%s477 + $0x8] sm:$0xf]
        %v480 = vld [vmem:[%s477 + $0x10] sm:$0xf]
        %v481 = vld [vmem:[%s477 + $0x18] sm:$0xf]
        %v482 = vld [vmem:[%s477 + $0x20] sm:$0xf]
        %v483 = vld [vmem:[%s477 + $0x28] sm:$0xf]
        %v484 = vld [vmem:[%s477 + $0x30] sm:$0xf]
        %v485 = vld [vmem:[%s477 + $0x38] sm:$0xf]
        %v486 = vld [vmem:[%s468 + $0x4] sm:$0x1]
        %v487 = vld [vmem:[%s468 + $0xc] sm:$0x1]
        %v488 = vld [vmem:[%s468 + $0x14] sm:$0x1]
        %v489 = vld [vmem:[%s468 + $0x1c] sm:$0x1]
        %v490 = vld [vmem:[%s468 + $0x24] sm:$0x1]
        %v491 = vld [vmem:[%s468 + $0x2c] sm:$0x1]
        %v492 = vld [vmem:[%s468 + $0x34] sm:$0x1]
        %v493 = vld [vmem:[%s468 + $0x3c] sm:$0x1]
        %v502 = vunpack.c.l.b16 %v428
        %v503 = vunpack.c.l.b16 %v429
        %v504 = vunpack.c.l.b16 %v430
        %v505 = vunpack.c.l.b16 %v431
        %v506 = vunpack.c.l.b16 %v432
        %v507 = vunpack.c.l.b16 %v433
        %v508 = vunpack.c.l.b16 %v434
        %v509 = vunpack.c.l.b16 %v435
        %v510 = vpack.c.b16 %v502, %v502
        %v511 = vpack.c.b16 %v503, %v503
        %v512 = vpack.c.b16 %v504, %v504
        %v513 = vpack.c.b16 %v505, %v505
        %v514 = vpack.c.b16 %v506, %v506
        %v515 = vpack.c.b16 %v507, %v507
        %v516 = vpack.c.b16 %v508, %v508
        %v517 = vpack.c.b16 %v509, %v509
        %518 = vrot.lane.b32.xlu0 %v510, 4
        %v519 = vpop.permute.xlu0 %518
        %520 = vrot.lane.b32.xlu0 %v511, 4
        %v521 = vpop.permute.xlu0 %520
        %522 = vrot.lane.b32.xlu0 %v512, 4
        %v523 = vpop.permute.xlu0 %522
        %524 = vrot.lane.b32.xlu0 %v513, 4
        %v525 = vpop.permute.xlu0 %524
        %526 = vrot.lane.b32.xlu0 %v514, 4
        %v527 = vpop.permute.xlu0 %526
        %528 = vrot.lane.b32.xlu0 %v515, 4
        %v529 = vpop.permute.xlu0 %528
        %530 = vrot.lane.b32.xlu0 %v516, 4
        %v531 = vpop.permute.xlu0 %530
        %532 = vrot.lane.b32.xlu0 %v517, 4
        %v533 = vpop.permute.xlu0 %532
        %v550 = vunpack.c.l.b16 %v420
        %v551 = vunpack.c.l.b16 %v436
        %v552 = vunpack.c.l.b16 %v421
        %v553 = vunpack.c.l.b16 %v437
        %v554 = vunpack.c.l.b16 %v422
        %v555 = vunpack.c.l.b16 %v438
        %v556 = vunpack.c.l.b16 %v423
        %v557 = vunpack.c.l.b16 %v439
        %v558 = vunpack.c.l.b16 %v424
        %v559 = vunpack.c.l.b16 %v440
        %v560 = vunpack.c.l.b16 %v425
        %v561 = vunpack.c.l.b16 %v441
        %v562 = vunpack.c.l.b16 %v426
        %v563 = vunpack.c.l.b16 %v442
        %v564 = vunpack.c.l.b16 %v427
        %v565 = vunpack.c.l.b16 %v443
        %v566 = vpack.c.b16 %v551, %v550
        %v567 = vpack.c.b16 %v553, %v552
        %v568 = vpack.c.b16 %v555, %v554
        %v569 = vpack.c.b16 %v557, %v556
        %v570 = vpack.c.b16 %v559, %v558
        %v571 = vpack.c.b16 %v561, %v560
        %v572 = vpack.c.b16 %v563, %v562
        %v573 = vpack.c.b16 %v565, %v564
        %v575 = vshrl.u32 %v566, 16
        %v577 = vshll.u32 %v566, 16
        %v579 = vrot.slane %v577, 1
        %v580 = vor.u32 %v575, %v579
        %v582 = vshrl.u32 %v567, 16
        %v584 = vshll.u32 %v567, 16
        %v586 = vrot.slane %v584, 1
        %v587 = vor.u32 %v582, %v586
        %v589 = vshrl.u32 %v568, 16
        %v591 = vshll.u32 %v568, 16
        %v593 = vrot.slane %v591, 1
        %v594 = vor.u32 %v589, %v593
        %v596 = vshrl.u32 %v569, 16
        %v598 = vshll.u32 %v569, 16
        %v600 = vrot.slane %v598, 1
        %v601 = vor.u32 %v596, %v600
        %v603 = vshrl.u32 %v570, 16
        %v605 = vshll.u32 %v570, 16
        %v607 = vrot.slane %v605, 1
        %v608 = vor.u32 %v603, %v607
        %v610 = vshrl.u32 %v571, 16
        %v612 = vshll.u32 %v571, 16
        %v614 = vrot.slane %v612, 1
        %v615 = vor.u32 %v610, %v614
        %v617 = vshrl.u32 %v572, 16
        %v619 = vshll.u32 %v572, 16
        %v621 = vrot.slane %v619, 1
        %v622 = vor.u32 %v617, %v621
        %v624 = vshrl.u32 %v573, 16
        %v626 = vshll.u32 %v573, 16
        %v628 = vrot.slane %v626, 1
        %v629 = vor.u32 %v624, %v628
        %630 = vrot.lane.b32.xlu0 %v580, 8
        %v631 = vpop.permute.xlu0 %630
        %632 = vrot.lane.b32.xlu0 %v587, 8
        %v633 = vpop.permute.xlu0 %632
        %634 = vrot.lane.b32.xlu0 %v594, 8
        %v635 = vpop.permute.xlu0 %634
        %636 = vrot.lane.b32.xlu0 %v601, 8
        %v637 = vpop.permute.xlu0 %636
        %638 = vrot.lane.b32.xlu0 %v608, 8
        %v639 = vpop.permute.xlu0 %638
        %640 = vrot.lane.b32.xlu0 %v615, 8
        %v641 = vpop.permute.xlu0 %640
        %642 = vrot.lane.b32.xlu0 %v622, 8
        %v643 = vpop.permute.xlu0 %642
        %644 = vrot.lane.b32.xlu0 %v629, 8
        %v645 = vpop.permute.xlu0 %644
        %v654 = vunpack.c.l.b16 %v444
        %v655 = vunpack.c.l.b16 %v445
        %v656 = vunpack.c.l.b16 %v446
        %v657 = vunpack.c.l.b16 %v447
        %v658 = vunpack.c.l.b16 %v448
        %v659 = vunpack.c.l.b16 %v449
        %v660 = vunpack.c.l.b16 %v450
        %v661 = vunpack.c.l.b16 %v451
        %v662 = vpack.c.b16 %v654, %v654
        %v663 = vpack.c.b16 %v655, %v655
        %v664 = vpack.c.b16 %v656, %v656
        %v665 = vpack.c.b16 %v657, %v657
        %v666 = vpack.c.b16 %v658, %v658
        %v667 = vpack.c.b16 %v659, %v659
        %v668 = vpack.c.b16 %v660, %v660
        %v669 = vpack.c.b16 %v661, %v661
        %670 = vrot.lane.b32.xlu0 %v662, 12
        %v671 = vpop.permute.xlu0 %670
        %672 = vrot.lane.b32.xlu0 %v663, 12
        %v673 = vpop.permute.xlu0 %672
        %674 = vrot.lane.b32.xlu0 %v664, 12
        %v675 = vpop.permute.xlu0 %674
        %676 = vrot.lane.b32.xlu0 %v665, 12
        %v677 = vpop.permute.xlu0 %676
        %678 = vrot.lane.b32.xlu0 %v666, 12
        %v679 = vpop.permute.xlu0 %678
        %680 = vrot.lane.b32.xlu0 %v667, 12
        %v681 = vpop.permute.xlu0 %680
        %682 = vrot.lane.b32.xlu0 %v668, 12
        %v683 = vpop.permute.xlu0 %682
        %684 = vrot.lane.b32.xlu0 %v669, 12
        %v685 = vpop.permute.xlu0 %684
        %v694 = vunpack.c.l.b16 %v452
        %v695 = vunpack.c.l.b16 %v453
        %v696 = vunpack.c.l.b16 %v454
        %v697 = vunpack.c.l.b16 %v455
        %v698 = vunpack.c.l.b16 %v456
        %v699 = vunpack.c.l.b16 %v457
        %v700 = vunpack.c.l.b16 %v458
        %v701 = vunpack.c.l.b16 %v459
        %v702 = vpack.c.b16 %v694, %v694
        %v703 = vpack.c.b16 %v695, %v695
        %v704 = vpack.c.b16 %v696, %v696
        %v705 = vpack.c.b16 %v697, %v697
        %v706 = vpack.c.b16 %v698, %v698
        %v707 = vpack.c.b16 %v699, %v699
        %v708 = vpack.c.b16 %v700, %v700
        %v709 = vpack.c.b16 %v701, %v701
        %710 = vrot.lane.b32.xlu0 %v702, 16
        %v711 = vpop.permute.xlu0 %710
        %712 = vrot.lane.b32.xlu0 %v703, 16
        %v713 = vpop.permute.xlu0 %712
        %714 = vrot.lane.b32.xlu0 %v704, 16
        %v715 = vpop.permute.xlu0 %714
        %716 = vrot.lane.b32.xlu0 %v705, 16
        %v717 = vpop.permute.xlu0 %716
        %718 = vrot.lane.b32.xlu0 %v706, 16
        %v719 = vpop.permute.xlu0 %718
        %720 = vrot.lane.b32.xlu0 %v707, 16
        %v721 = vpop.permute.xlu0 %720
        %722 = vrot.lane.b32.xlu0 %v708, 16
        %v723 = vpop.permute.xlu0 %722
        %724 = vrot.lane.b32.xlu0 %v709, 16
        %v725 = vpop.permute.xlu0 %724
        %v734 = vunpack.c.l.b16 %v460
        %v735 = vunpack.c.l.b16 %v461
        %v736 = vunpack.c.l.b16 %v462
        %v737 = vunpack.c.l.b16 %v463
        %v738 = vunpack.c.l.b16 %v464
        %v739 = vunpack.c.l.b16 %v465
        %v740 = vunpack.c.l.b16 %v466
        %v741 = vunpack.c.l.b16 %v467
        %v742 = vpack.c.b16 %v734, %v654
        %v743 = vpack.c.b16 %v735, %v655
        %v744 = vpack.c.b16 %v736, %v656
        %v745 = vpack.c.b16 %v737, %v657
        %v746 = vpack.c.b16 %v738, %v658
        %v747 = vpack.c.b16 %v739, %v659
        %v748 = vpack.c.b16 %v740, %v660
        %v749 = vpack.c.b16 %v741, %v661
        %v751 = vshrl.u32 %v742, 16
        %v753 = vshll.u32 %v742, 16
        %v755 = vrot.slane %v753, 1
        %v756 = vor.u32 %v751, %v755
        %v758 = vshrl.u32 %v743, 16
        %v760 = vshll.u32 %v743, 16
        %v762 = vrot.slane %v760, 1
        %v763 = vor.u32 %v758, %v762
        %v765 = vshrl.u32 %v744, 16
        %v767 = vshll.u32 %v744, 16
        %v769 = vrot.slane %v767, 1
        %v770 = vor.u32 %v765, %v769
        %v772 = vshrl.u32 %v745, 16
        %v774 = vshll.u32 %v745, 16
        %v776 = vrot.slane %v774, 1
        %v777 = vor.u32 %v772, %v776
        %v779 = vshrl.u32 %v746, 16
        %v781 = vshll.u32 %v746, 16
        %v783 = vrot.slane %v781, 1
        %v784 = vor.u32 %v779, %v783
        %v786 = vshrl.u32 %v747, 16
        %v788 = vshll.u32 %v747, 16
        %v790 = vrot.slane %v788, 1
        %v791 = vor.u32 %v786, %v790
        %v793 = vshrl.u32 %v748, 16
        %v795 = vshll.u32 %v748, 16
        %v797 = vrot.slane %v795, 1
        %v798 = vor.u32 %v793, %v797
        %v800 = vshrl.u32 %v749, 16
        %v802 = vshll.u32 %v749, 16
        %v804 = vrot.slane %v802, 1
        %v805 = vor.u32 %v800, %v804
        %806 = vrot.lane.b32.xlu0 %v756, 20
        %v807 = vpop.permute.xlu0 %806
        %808 = vrot.lane.b32.xlu0 %v763, 20
        %v809 = vpop.permute.xlu0 %808
        %810 = vrot.lane.b32.xlu0 %v770, 20
        %v811 = vpop.permute.xlu0 %810
        %812 = vrot.lane.b32.xlu0 %v777, 20
        %v813 = vpop.permute.xlu0 %812
        %814 = vrot.lane.b32.xlu0 %v784, 20
        %v815 = vpop.permute.xlu0 %814
        %816 = vrot.lane.b32.xlu0 %v791, 20
        %v817 = vpop.permute.xlu0 %816
        %818 = vrot.lane.b32.xlu0 %v798, 20
        %v819 = vpop.permute.xlu0 %818
        %820 = vrot.lane.b32.xlu0 %v805, 20
        %v821 = vpop.permute.xlu0 %820
        %v830 = vunpack.c.l.b16 %v469
        %v831 = vunpack.c.l.b16 %v470
        %v832 = vunpack.c.l.b16 %v471
        %v833 = vunpack.c.l.b16 %v472
        %v834 = vunpack.c.l.b16 %v473
        %v835 = vunpack.c.l.b16 %v474
        %v836 = vunpack.c.l.b16 %v475
        %v837 = vunpack.c.l.b16 %v476
        %v838 = vpack.c.b16 %v830, %v830
        %v839 = vpack.c.b16 %v831, %v831
        %v840 = vpack.c.b16 %v832, %v832
        %v841 = vpack.c.b16 %v833, %v833
        %v842 = vpack.c.b16 %v834, %v834
        %v843 = vpack.c.b16 %v835, %v835
        %v844 = vpack.c.b16 %v836, %v836
        %v845 = vpack.c.b16 %v837, %v837
        %846 = vrot.lane.b32.xlu0 %v838, 24
        %v847 = vpop.permute.xlu0 %846
        %848 = vrot.lane.b32.xlu0 %v839, 24
        %v849 = vpop.permute.xlu0 %848
        %850 = vrot.lane.b32.xlu0 %v840, 24
        %v851 = vpop.permute.xlu0 %850
        %852 = vrot.lane.b32.xlu0 %v841, 24
        %v853 = vpop.permute.xlu0 %852
        %854 = vrot.lane.b32.xlu0 %v842, 24
        %v855 = vpop.permute.xlu0 %854
        %856 = vrot.lane.b32.xlu0 %v843, 24
        %v857 = vpop.permute.xlu0 %856
        %858 = vrot.lane.b32.xlu0 %v844, 24
        %v859 = vpop.permute.xlu0 %858
        %860 = vrot.lane.b32.xlu0 %v845, 24
        %v861 = vpop.permute.xlu0 %860
        %v870 = vunpack.c.l.b16 %v478
        %v871 = vunpack.c.l.b16 %v479
        %v872 = vunpack.c.l.b16 %v480
        %v873 = vunpack.c.l.b16 %v481
        %v874 = vunpack.c.l.b16 %v482
        %v875 = vunpack.c.l.b16 %v483
        %v876 = vunpack.c.l.b16 %v484
        %v877 = vunpack.c.l.b16 %v485
        %v878 = vpack.c.b16 %v870, %v870
        %v879 = vpack.c.b16 %v871, %v871
        %v880 = vpack.c.b16 %v872, %v872
        %v881 = vpack.c.b16 %v873, %v873
        %v882 = vpack.c.b16 %v874, %v874
        %v883 = vpack.c.b16 %v875, %v875
        %v884 = vpack.c.b16 %v876, %v876
        %v885 = vpack.c.b16 %v877, %v877
        %886 = vrot.lane.b32.xlu0 %v878, 28
        %v887 = vpop.permute.xlu0 %886
        %888 = vrot.lane.b32.xlu0 %v879, 28
        %v889 = vpop.permute.xlu0 %888
        %890 = vrot.lane.b32.xlu0 %v880, 28
        %v891 = vpop.permute.xlu0 %890
        %892 = vrot.lane.b32.xlu0 %v881, 28
        %v893 = vpop.permute.xlu0 %892
        %894 = vrot.lane.b32.xlu0 %v882, 28
        %v895 = vpop.permute.xlu0 %894
        %896 = vrot.lane.b32.xlu0 %v883, 28
        %v897 = vpop.permute.xlu0 %896
        %898 = vrot.lane.b32.xlu0 %v884, 28
        %v899 = vpop.permute.xlu0 %898
        %900 = vrot.lane.b32.xlu0 %v885, 28
        %v901 = vpop.permute.xlu0 %900
        %v910 = vunpack.c.l.b16 %v486
        %v911 = vunpack.c.l.b16 %v487
        %v912 = vunpack.c.l.b16 %v488
        %v913 = vunpack.c.l.b16 %v489
        %v914 = vunpack.c.l.b16 %v490
        %v915 = vunpack.c.l.b16 %v491
        %v916 = vunpack.c.l.b16 %v492
        %v917 = vunpack.c.l.b16 %v493
        %v918 = vpack.c.b16 %v910, %v830
        %v919 = vpack.c.b16 %v911, %v831
        %v920 = vpack.c.b16 %v912, %v832
        %v921 = vpack.c.b16 %v913, %v833
        %v922 = vpack.c.b16 %v914, %v834
        %v923 = vpack.c.b16 %v915, %v835
        %v924 = vpack.c.b16 %v916, %v836
        %v925 = vpack.c.b16 %v917, %v837
        %v927 = vshrl.u32 %v918, 16
        %v929 = vshll.u32 %v918, 16
        %v931 = vrot.slane %v929, 1
        %v932 = vor.u32 %v927, %v931
        %v934 = vshrl.u32 %v919, 16
        %v936 = vshll.u32 %v919, 16
        %v938 = vrot.slane %v936, 1
        %v939 = vor.u32 %v934, %v938
        %v941 = vshrl.u32 %v920, 16
        %v943 = vshll.u32 %v920, 16
        %v945 = vrot.slane %v943, 1
        %v946 = vor.u32 %v941, %v945
        %v948 = vshrl.u32 %v921, 16
        %v950 = vshll.u32 %v921, 16
        %v952 = vrot.slane %v950, 1
        %v953 = vor.u32 %v948, %v952
        %v955 = vshrl.u32 %v922, 16
        %v957 = vshll.u32 %v922, 16
        %v959 = vrot.slane %v957, 1
        %v960 = vor.u32 %v955, %v959
        %v962 = vshrl.u32 %v923, 16
        %v964 = vshll.u32 %v923, 16
        %v966 = vrot.slane %v964, 1
        %v967 = vor.u32 %v962, %v966
        %v969 = vshrl.u32 %v924, 16
        %v971 = vshll.u32 %v924, 16
        %v973 = vrot.slane %v971, 1
        %v974 = vor.u32 %v969, %v973
        %v976 = vshrl.u32 %v925, 16
        %v978 = vshll.u32 %v925, 16
        %v980 = vrot.slane %v978, 1
        %v981 = vor.u32 %v976, %v980
        %982 = vrot.lane.b32.xlu0 %v932, 32
        %v983 = vpop.permute.xlu0 %982
        %984 = vrot.lane.b32.xlu0 %v939, 32
        %v985 = vpop.permute.xlu0 %984
        %986 = vrot.lane.b32.xlu0 %v946, 32
        %v987 = vpop.permute.xlu0 %986
        %988 = vrot.lane.b32.xlu0 %v953, 32
        %v989 = vpop.permute.xlu0 %988
        %990 = vrot.lane.b32.xlu0 %v960, 32
        %v991 = vpop.permute.xlu0 %990
        %992 = vrot.lane.b32.xlu0 %v967, 32
        %v993 = vpop.permute.xlu0 %992
        %994 = vrot.lane.b32.xlu0 %v974, 32
        %v995 = vpop.permute.xlu0 %994
        %996 = vrot.lane.b32.xlu0 %v981, 32
        %v997 = vpop.permute.xlu0 %996
        %vm998 = vcmask 31744
        %v1001 = vsel %vm998, %v420, %v519
        %v1004 = vsel %vm998, %v421, %v521
        %v1007 = vsel %vm998, %v422, %v523
        %v1010 = vsel %vm998, %v423, %v525
        %v1013 = vsel %vm998, %v424, %v527
        %v1016 = vsel %vm998, %v425, %v529
        %v1019 = vsel %vm998, %v426, %v531
        %v1022 = vsel %vm998, %v427, %v533
        %vm1023 = vcmask 64512
        %v1025 = vsel %vm1023, %v1001, %v631
        %v1027 = vsel %vm1023, %v1004, %v633
        %v1029 = vsel %vm1023, %v1007, %v635
        %v1031 = vsel %vm1023, %v1010, %v637
        %v1033 = vsel %vm1023, %v1013, %v639
        %v1035 = vsel %vm1023, %v1016, %v641
        %v1037 = vsel %vm1023, %v1019, %v643
        %v1039 = vsel %vm1023, %v1022, %v645
        %vm1040 = vcmask 97280
        %v1042 = vsel %vm1040, %v1025, %v671
        %v1044 = vsel %vm1040, %v1027, %v673
        %v1046 = vsel %vm1040, %v1029, %v675
        %v1048 = vsel %vm1040, %v1031, %v677
        %v1050 = vsel %vm1040, %v1033, %v679
        %v1052 = vsel %vm1040, %v1035, %v681
        %v1054 = vsel %vm1040, %v1037, %v683
        %v1056 = vsel %vm1040, %v1039, %v685
        %vm1057 = vcmask 130048
        %v1059 = vsel %vm1057, %v1042, %v711
        %v1061 = vsel %vm1057, %v1044, %v713
        %v1063 = vsel %vm1057, %v1046, %v715
        %v1065 = vsel %vm1057, %v1048, %v717
        %v1067 = vsel %vm1057, %v1050, %v719
        %v1069 = vsel %vm1057, %v1052, %v721
        %v1071 = vsel %vm1057, %v1054, %v723
        %v1073 = vsel %vm1057, %v1056, %v725
        %vm1074 = vcmask 162816
        %v1076 = vsel %vm1074, %v1059, %v807
        %v1078 = vsel %vm1074, %v1061, %v809
        %v1080 = vsel %vm1074, %v1063, %v811
        %v1082 = vsel %vm1074, %v1065, %v813
        %v1084 = vsel %vm1074, %v1067, %v815
        %v1086 = vsel %vm1074, %v1069, %v817
        %v1088 = vsel %vm1074, %v1071, %v819
        %v1090 = vsel %vm1074, %v1073, %v821
        %vm1091 = vcmask 195584
        %v1093 = vsel %vm1091, %v1076, %v847
        %v1095 = vsel %vm1091, %v1078, %v849
        %v1097 = vsel %vm1091, %v1080, %v851
        %v1099 = vsel %vm1091, %v1082, %v853
        %v1101 = vsel %vm1091, %v1084, %v855
        %v1103 = vsel %vm1091, %v1086, %v857
        %v1105 = vsel %vm1091, %v1088, %v859
        %v1107 = vsel %vm1091, %v1090, %v861
        %vm1108 = vcmask 228352
        %v1110 = vsel %vm1108, %v1093, %v887
        %v1112 = vsel %vm1108, %v1095, %v889
        %v1114 = vsel %vm1108, %v1097, %v891
        %v1116 = vsel %vm1108, %v1099, %v893
        %v1118 = vsel %vm1108, %v1101, %v895
        %v1120 = vsel %vm1108, %v1103, %v897
        %v1122 = vsel %vm1108, %v1105, %v899
        %v1124 = vsel %vm1108, %v1107, %v901
        %vm1125 = vcmask 261120
        %v1127 = vsel %vm1125, %v1110, %v983
        %v1129 = vsel %vm1125, %v1112, %v985
        %v1131 = vsel %vm1125, %v1114, %v987
        %v1133 = vsel %vm1125, %v1116, %v989
        %v1135 = vsel %vm1125, %v1118, %v991
        %v1137 = vsel %vm1125, %v1120, %v993
        %v1139 = vsel %vm1125, %v1122, %v995
        %v1141 = vsel %vm1125, %v1124, %v997
        %v1142 = vld [vmem:[%s4] sm:$0xf]
        %v1143 = vld [vmem:[%s4 + $0x4] sm:$0xf]
        %v1144 = vld [vmem:[%s4 + $0x8] sm:$0xf]
        %v1145 = vld [vmem:[%s4 + $0xc] sm:$0xf]
        %v1146 = vld [vmem:[%s4 + $0x10] sm:$0x3]
        %v1155 = vunpack.c.l.b16 %v1127
        %v1156 = vunpack.c.l.b16 %v1129
        %v1157 = vunpack.c.l.b16 %v1131
        %v1158 = vunpack.c.l.b16 %v1133
        %v1159 = vunpack.c.l.b16 %v1135
        %v1160 = vunpack.c.l.b16 %v1137
        %v1161 = vunpack.c.l.b16 %v1139
        %v1162 = vunpack.c.l.b16 %v1141
        %v1163 = vpack.c.b16 %v1156, %v1155
        %v1164 = vpack.c.b16 %v1158, %v1157
        %v1165 = vpack.c.b16 %v1160, %v1159
        %v1166 = vpack.c.b16 %v1162, %v1161
        %v1172 = vunpack.c.l.b16 %v1142
        %v1173 = vunpack.c.l.b16 %v1143
        %v1174 = vunpack.c.l.b16 %v1144
        %v1175 = vunpack.c.l.b16 %v1145
        %v1176 = vunpack.c.l.b16 %v1146
        %v1177 = vpack.c.b16 %v1173, %v1172
        %v1178 = vpack.c.b16 %v1175, %v1174
        %v1179 = vpack.c.b16 %v1176, %v1176
        %vm1182 = vcmask 293888
        %v1184 = vsel %vm1182, %v1163, 0
        %v1187 = vsel %vm1182, %v1164, 0
        %v1190 = vsel %vm1182, %v1165, 0
        %v1193 = vsel %vm1182, %v1166, 0
        %vm1195 = vcmask 1041408
        %v1197 = vsel %vm1195, %v1179, 0
        %1199 = vmatprep.subr.bf16.mxu0 0
        %1200 = vmatpush1.bf16.msra.mxu0 %v1177
        %1201 = vmatprep.subr.bf16.mxu0 0
        %1202 = vmatpush1.bf16.msra.mxu0 %v1178
        %1203 = vmatprep.subr.bf16.mxu0 0
        %1204 = vmatpush1.bf16.msra.mxu0 %v1197
        %1205 = vmatprep.subr.bf16.mxu0 0
        %1206 = vmatpush1.bf16.msra.mxu0 0
        %1207 = vmatprep.subr.bf16.mxu0 0
        %1208 = vmatpush1.bf16.msra.mxu0 0
        %1209 = vmatprep.subr.bf16.mxu0 0
        %1210 = vmatpush1.bf16.msra.mxu0 0
        %1211 = vmatprep.subr.bf16.mxu0 0
        %1212 = vmatpush1.bf16.msra.mxu0 0
        %1213 = vmatprep.subr.bf16.mxu0 0
        %1214 = vmatpush1.bf16.msra.mxu0 0
        %1215 = vmatprep.subr.bf16.mxu0 0
        %1216 = vmatpush1.bf16.msra.mxu0 0
        %1217 = vmatprep.subr.bf16.mxu0 0
        %1218 = vmatpush1.bf16.msra.mxu0 0
        %1219 = vmatprep.subr.bf16.mxu0 0
        %1220 = vmatpush1.bf16.msra.mxu0 0
        %1221 = vmatprep.subr.bf16.mxu0 0
        %1222 = vmatpush1.bf16.msra.mxu0 0
        %1223 = vmatprep.subr.bf16.mxu0 0
        %1224 = vmatpush1.bf16.msra.mxu0 0
        %1225 = vmatprep.subr.bf16.mxu0 0
        %1226 = vmatpush1.bf16.msra.mxu0 0
        %1227 = vmatprep.subr.bf16.mxu0 0
        %1228 = vmatpush1.bf16.msra.mxu0 0
        %1229 = vmatprep.subr.bf16.mxu0 0
        %1230 = vmatpush1.bf16.msra.mxu0 0
        %1231 = vmatprep.mubr.bf16.mxu0 0
        %1232 = vmatmul.mubr.bf16.gmra.mrb[0].mxu0 %v1184
        %v1233 = vpop.f32.mrb[0].mxu0
        %v1234 = vadd.f32 0.0, %v1233
        %v1235 = vpop.f32.mrb[0].mxu0
        %v1236 = vpop.f32.mrb[0].mxu0
        %v1237 = vadd.f32 0.0, %v1236
        %v1238 = vpop.f32.mrb[0].mxu0
        %1239 = vmatprep.mubr.bf16.mxu0 0
        %1240 = vmatmul.mubr.bf16.gmra.mrb[0].mxu0 %v1187
        %v1241 = vpop.f32.mrb[0].mxu0
        %v1242 = vadd.f32 0.0, %v1241
        %v1243 = vpop.f32.mrb[0].mxu0
        %v1244 = vpop.f32.mrb[0].mxu0
        %v1245 = vadd.f32 0.0, %v1244
        %v1246 = vpop.f32.mrb[0].mxu0
        %1247 = vmatprep.mubr.bf16.mxu0 0
        %1248 = vmatmul.mubr.bf16.gmra.mrb[0].mxu0 %v1190
        %v1249 = vpop.f32.mrb[0].mxu0
        %v1250 = vadd.f32 0.0, %v1249
        %v1251 = vpop.f32.mrb[0].mxu0
        %v1252 = vpop.f32.mrb[0].mxu0
        %v1253 = vadd.f32 0.0, %v1252
        %v1254 = vpop.f32.mrb[0].mxu0
        %1255 = vmatprep.mubr.bf16.mxu0 0
        %1256 = vmatmul.mubr.bf16.gmra.mrb[0].mxu0 %v1193
        %v1257 = vpop.f32.mrb[0].mxu0
        %v1258 = vadd.f32 0.0, %v1257
        %v1259 = vpop.f32.mrb[0].mxu0
        %v1260 = vpop.f32.mrb[0].mxu0
        %v1261 = vadd.f32 0.0, %v1260
        %v1262 = vpop.f32.mrb[0].mxu0
        %1263 = vdwg.mxu0
        %1264 = vst [vmem:[%s377] sm:$0xff] %v1234
        %1265 = vst [vmem:[%s377 + $0x8] sm:$0xff] %v1237
        %1266 = vst [vmem:[%s377 + $0x10] sm:$0xff] %v1242
        %1267 = vst [vmem:[%s377 + $0x18] sm:$0xff] %v1245
        %1268 = vst [vmem:[%s377 + $0x20] sm:$0xff] %v1250
        %1269 = vst [vmem:[%s377 + $0x28] sm:$0xff] %v1253
        %1270 = vst [vmem:[%s377 + $0x30] sm:$0xff] %v1258
        %1271 = vst [vmem:[%s377 + $0x38] sm:$0xff] %v1261
        %v1272 = vadd.f32 %v1234, %v1237
        %v1273 = vadd.f32 %v1272, %v1242
        %v1274 = vadd.f32 %v1273, %v1245
        %v1275 = vadd.f32 %v1274, %v1250
        %v1276 = vadd.f32 %v1275, %v1253
        %v1277 = vadd.f32 %v1276, %v1258
        %v1278 = vadd.f32 %v1277, %v1261
        %v1279 = vrot.slane %v1278, 4
        %v1280 = vadd.f32 %v1278, %v1279
        %v1281 = vrot.slane %v1280, 2
        %v1282 = vadd.f32 %v1280, %v1281
        %v1283 = vrot.slane %v1282, 1
        %v1284 = vadd.f32 %v1282, %v1283
        %v1285 = vmul.f32 %v1234, %v1234
        %v1286 = vmul.f32 %v1237, %v1237
        %v1287 = vmul.f32 %v1242, %v1242
        %v1288 = vmul.f32 %v1245, %v1245
        %v1289 = vmul.f32 %v1250, %v1250
        %v1290 = vmul.f32 %v1253, %v1253
        %v1291 = vmul.f32 %v1258, %v1258
        %v1292 = vmul.f32 %v1261, %v1261
        %v1293 = vadd.f32 %v1285, %v1286
        %v1294 = vadd.f32 %v1293, %v1287
        %v1295 = vadd.f32 %v1294, %v1288
        %v1296 = vadd.f32 %v1295, %v1289
        %v1297 = vadd.f32 %v1296, %v1290
        %v1298 = vadd.f32 %v1297, %v1291
        %v1299 = vadd.f32 %v1298, %v1292
        %v1300 = vrot.slane %v1299, 4
        %v1301 = vadd.f32 %v1299, %v1300
        %v1302 = vrot.slane %v1301, 2
        %v1303 = vadd.f32 %v1301, %v1302
        %v1304 = vrot.slane %v1303, 1
        %v1305 = vadd.f32 %v1303, %v1304
        %vm1306 = vcmask 1040384
        %v1307 = vsel %vm1306, %v1284, %v1305
        %1308 = vst [vmem:[%s391] sm:$0x3] %v1307
        %v1309 = vld [vmem:[%s5] sm:$0x3]
        %v1310 = vpack.c.b16 %v695, %v694
        %v1311 = vpack.c.b16 %v697, %v696
        %v1312 = vpack.c.b16 %v699, %v698
        %v1313 = vpack.c.b16 %v701, %v700
        %v1315 = vsel %vm998, %v1310, 0
        %v1318 = vsel %vm998, %v1311, 0
        %v1321 = vsel %vm998, %v1312, 0
        %v1324 = vsel %vm998, %v1313, 0
        %v1327 = vsel %vm1195, %v1309, 0
        %1329 = vmatprep.subr.bf16.mxu0 0
        %1330 = vmatpush1.bf16.msra.mxu0 %v1327
        %1331 = vmatprep.subr.bf16.mxu0 0
        %1332 = vmatpush1.bf16.msra.mxu0 0
        %1333 = vmatprep.subr.bf16.mxu0 0
        %1334 = vmatpush1.bf16.msra.mxu0 0
        %1335 = vmatprep.subr.bf16.mxu0 0
        %1336 = vmatpush1.bf16.msra.mxu0 0
        %1337 = vmatprep.subr.bf16.mxu0 0
        %1338 = vmatpush1.bf16.msra.mxu0 0
        %1339 = vmatprep.subr.bf16.mxu0 0
        %1340 = vmatpush1.bf16.msra.mxu0 0
        %1341 = vmatprep.subr.bf16.mxu0 0
        %1342 = vmatpush1.bf16.msra.mxu0 0
        %1343 = vmatprep.subr.bf16.mxu0 0
        %1344 = vmatpush1.bf16.msra.mxu0 0
        %1345 = vmatprep.subr.bf16.mxu0 0
        %1346 = vmatpush1.bf16.msra.mxu0 0
        %1347 = vmatprep.subr.bf16.mxu0 0
        %1348 = vmatpush1.bf16.msra.mxu0 0
        %1349 = vmatprep.subr.bf16.mxu0 0
        %1350 = vmatpush1.bf16.msra.mxu0 0
        %1351 = vmatprep.subr.bf16.mxu0 0
        %1352 = vmatpush1.bf16.msra.mxu0 0
        %1353 = vmatprep.subr.bf16.mxu0 0
        %1354 = vmatpush1.bf16.msra.mxu0 0
        %1355 = vmatprep.subr.bf16.mxu0 0
        %1356 = vmatpush1.bf16.msra.mxu0 0
        %1357 = vmatprep.subr.bf16.mxu0 0
        %1358 = vmatpush1.bf16.msra.mxu0 0
        %1359 = vmatprep.subr.bf16.mxu0 0
        %1360 = vmatpush1.bf16.msra.mxu0 0
        %1361 = vmatprep.mubr.bf16.mxu0 0
        %1362 = vmatmul.mubr.bf16.gmra.mrb[0].mxu0 %v1315
        %v1363 = vpop.f32.mrb[0].mxu0
        %v1364 = vadd.f32 0.0, %v1363
        %v1365 = vpop.f32.mrb[0].mxu0
        %v1366 = vpop.f32.mrb[0].mxu0
        %v1367 = vadd.f32 0.0, %v1366
        %v1368 = vpop.f32.mrb[0].mxu0
        %1369 = vmatprep.mubr.bf16.mxu0 0
        %1370 = vmatmul.mubr.bf16.gmra.mrb[0].mxu0 %v1318
        %v1371 = vpop.f32.mrb[0].mxu0
        %v1372 = vadd.f32 0.0, %v1371
        %v1373 = vpop.f32.mrb[0].mxu0
        %v1374 = vpop.f32.mrb[0].mxu0
        %v1375 = vadd.f32 0.0, %v1374
        %v1376 = vpop.f32.mrb[0].mxu0
        %1377 = vmatprep.mubr.bf16.mxu0 0
        %1378 = vmatmul.mubr.bf16.gmra.mrb[0].mxu0 %v1321
        %v1379 = vpop.f32.mrb[0].mxu0
        %v1380 = vadd.f32 0.0, %v1379
        %v1381 = vpop.f32.mrb[0].mxu0
        %v1382 = vpop.f32.mrb[0].mxu0
        %v1383 = vadd.f32 0.0, %v1382
        %v1384 = vpop.f32.mrb[0].mxu0
        %1385 = vmatprep.mubr.bf16.mxu0 0
        %1386 = vmatmul.mubr.bf16.gmra.mrb[0].mxu0 %v1324
        %v1387 = vpop.f32.mrb[0].mxu0
        %v1388 = vadd.f32 0.0, %v1387
        %v1389 = vpop.f32.mrb[0].mxu0
        %v1390 = vpop.f32.mrb[0].mxu0
        %v1391 = vadd.f32 0.0, %v1390
        %v1392 = vpop.f32.mrb[0].mxu0
        %1393 = vdwg.mxu0
        %1394 = vst [vmem:[%s384] sm:$0xff] %v1364
        %1395 = vst [vmem:[%s384 + $0x8] sm:$0xff] %v1367
        %1396 = vst [vmem:[%s384 + $0x10] sm:$0xff] %v1372
        %1397 = vst [vmem:[%s384 + $0x18] sm:$0xff] %v1375
        %1398 = vst [vmem:[%s384 + $0x20] sm:$0xff] %v1380
        %1399 = vst [vmem:[%s384 + $0x28] sm:$0xff] %v1383
        %1400 = vst [vmem:[%s384 + $0x30] sm:$0xff] %v1388
        %1401 = vst [vmem:[%s384 + $0x38] sm:$0xff] %v1391
        %v1402 = vadd.f32 %v1364, %v1367
        %v1403 = vadd.f32 %v1402, %v1372
        %v1404 = vadd.f32 %v1403, %v1375
        %v1405 = vadd.f32 %v1404, %v1380
        %v1406 = vadd.f32 %v1405, %v1383
        %v1407 = vadd.f32 %v1406, %v1388
        %v1408 = vadd.f32 %v1407, %v1391
        %v1409 = vrot.slane %v1408, 4
        %v1410 = vadd.f32 %v1408, %v1409
        %v1411 = vrot.slane %v1410, 2
        %v1412 = vadd.f32 %v1410, %v1411
        %v1413 = vrot.slane %v1412, 1
        %v1414 = vadd.f32 %v1412, %v1413
        %v1415 = vmul.f32 %v1364, %v1364
        %v1416 = vmul.f32 %v1367, %v1367
        %v1417 = vmul.f32 %v1372, %v1372
        %v1418 = vmul.f32 %v1375, %v1375
        %v1419 = vmul.f32 %v1380, %v1380
        %v1420 = vmul.f32 %v1383, %v1383
        %v1421 = vmul.f32 %v1388, %v1388
        %v1422 = vmul.f32 %v1391, %v1391
        %v1423 = vadd.f32 %v1415, %v1416
        %v1424 = vadd.f32 %v1423, %v1417
        %v1425 = vadd.f32 %v1424, %v1418
        %v1426 = vadd.f32 %v1425, %v1419
        %v1427 = vadd.f32 %v1426, %v1420
        %v1428 = vadd.f32 %v1427, %v1421
        %v1429 = vadd.f32 %v1428, %v1422
        %v1430 = vrot.slane %v1429, 4
        %v1431 = vadd.f32 %v1429, %v1430
        %v1432 = vrot.slane %v1431, 2
        %v1433 = vadd.f32 %v1431, %v1432
        %v1434 = vrot.slane %v1433, 1
        %v1435 = vadd.f32 %v1433, %v1434
        %v1436 = vsel %vm1306, %v1414, %v1435
        %1437 = vst [vmem:[%s398] sm:$0x3] %v1436
        %s1438 = sand.u32 %s184, 1
        %s1439 = scalar_lea.sflag [#allocation3], %s1438
        %s1440 = sand.u32 %s184, 1
        %s1441 = smul.addr %s1440, 64
        %s1442 = scalar_lea.vmem [#allocation2], %s1441
        %s1443 = sand.u32 %s30, 1
        %s1444 = scalar_lea.sflag [#allocation5], %s1443
        %s1445 = sand.u32 %s210, 1
        %s1446 = smul.addr %s1445, 64
        %s1447 = scalar_lea.vmem [#allocation4], %s1446
        %s1448 = sand.u32 %s30, 1
        %s1449 = scalar_lea.sflag [#allocation5], %s1448
        %s1450 = sand.u32 %s236, 1
        %s1451 = smul.addr %s1450, 2
        %s1452 = scalar_lea.vmem [#allocation6], %s1451
        %s1453 = sand.u32 %s262, 1
        %s1454 = scalar_lea.sflag [#allocation8], %s1453
        %s1455 = sand.u32 %s262, 1
        %s1456 = smul.addr %s1455, 2
        %s1457 = scalar_lea.vmem [#allocation7], %s1456
        // Predicated region
        $region45: #{tpu_custom_call.1} parent=43 // pred_check
          %p1458 = pneg %p194
        $region46: #{tpu_custom_call.1} parent=43 // pred_check_branch
          %1460 = sbr.rel (%p1458) target = $region48
        $region47: #{tpu_custom_call.1} parent=43 // pred_region
          %s1462 = ssub.s32 1024, 1024
          %1463 = vsyncadd %s1439, %s1462
          %s1464 = smul.addr %s30, 8
          %s1465 = smul.addr %s1464, 128
          %s1466 = scalar_lea.hbm %s6, %s1465
          %s1467 = sshll.u32 %s1442, 4
          %s1468 = int_to_ptr.vmem [resolvable:$true] %s1467
          %1473 = dma.vmem_to_hbm [thread:$0]  %s1468, 1024, %s1466, %s1439, 128, 128, 8
        $region48: #{tpu_custom_call.1} parent=43 // pred_fallthru
          _
        // Predicated region
        $region49: #{tpu_custom_call.1} parent=43 // pred_check
          %p1474 = pneg %p220
        $region50: #{tpu_custom_call.1} parent=43 // pred_check_branch
          %1476 = sbr.rel (%p1474) target = $region52
        $region51: #{tpu_custom_call.1} parent=43 // pred_region
          %s1478 = ssub.s32 1024, 1024
          %1479 = vsyncadd %s1444, %s1478
          %s1480 = smul.addr %s30, 8
          %s1481 = smul.addr %s1480, 128
          %s1482 = scalar_lea.hbm %s7, %s1481
          %s1483 = sshll.u32 %s1447, 4
          %s1484 = int_to_ptr.vmem [resolvable:$true] %s1483
          %1489 = dma.vmem_to_hbm [thread:$0]  %s1484, 1024, %s1482, %s1444, 128, 128, 8
        $region52: #{tpu_custom_call.1} parent=43 // pred_fallthru
          _
        // Predicated region
        $region53: #{tpu_custom_call.1} parent=43 // pred_check
          %p1490 = pneg %p246
        $region54: #{tpu_custom_call.1} parent=43 // pred_check_branch
          %1492 = sbr.rel (%p1490) target = $region56
        $region55: #{tpu_custom_call.1} parent=43 // pred_region
          %s1494 = ssub.s32 32, 32
          %1495 = vsyncadd %s1449, %s1494
          %s1496 = smul.addr %s30, 32
          %s1497 = scalar_lea.hbm %s8, %s1496
          %s1499 = sshll.u32 %s1452, 4
          %s1500 = int_to_ptr.vmem [resolvable:$true] %s1499
          %1502 = dma.vmem_to_hbm [thread:$0]  %s1500, 32, %s1497, %s1449
        $region56: #{tpu_custom_call.1} parent=43 // pred_fallthru
          _
        // Predicated region
        $region57: #{tpu_custom_call.1} parent=43 // pred_check
          %p1503 = pneg %p272
        $region58: #{tpu_custom_call.1} parent=43 // pred_check_branch
          %1505 = sbr.rel (%p1503) target = $region60
        $region59: #{tpu_custom_call.1} parent=43 // pred_region
          %s1507 = ssub.s32 32, 32
          %1508 = vsyncadd %s1454, %s1507
          %s1509 = smul.addr %s30, 32
          %s1510 = scalar_lea.hbm %s9, %s1509
          %s1512 = sshll.u32 %s1457, 4
          %s1513 = int_to_ptr.vmem [resolvable:$true] %s1512
          %1515 = dma.vmem_to_hbm [thread:$0]  %s1513, 32, %s1510, %s1454
        $region60: #{tpu_custom_call.1} parent=43 // pred_fallthru
          _
      $region44: #{tpu_custom_call.1} parent=5 // pred_fallthru
        _
      %p1516 = scmp.le.s32.totalorder 2, %s25
      // Predicated region
      $region61: #{tpu_custom_call.1} parent=5 // pred_check
        %p1517 = pneg %p1516
      $region62: #{tpu_custom_call.1} parent=5 // pred_check_branch
        %1519 = sbr.rel (%p1517) target = $region64
      $region63: #{tpu_custom_call.1} parent=5 // pred_region
        %s1520 = ssub.s32 %s25, 2
        // Predicated region
        $region65: #{tpu_custom_call.1} parent=63 // pred_check
          %p1521 = pneg %p200
        $region66: #{tpu_custom_call.1} parent=63 // pred_check_branch
          %1523 = sbr.rel (%p1521) target = $region68
        $region67: #{tpu_custom_call.1} parent=63 // pred_region
          %s1524 = sand.u32 %s185, 1
          %s1525 = scalar_lea.sflag [#allocation3], %s1524
          %s1526 = sand.u32 %s185, 1
          %s1527 = smul.addr %s1526, 64
          %s1528 = scalar_lea.vmem [#allocation2], %s1527
          %1529 = dma.done %s1525, 1024
        $region68: #{tpu_custom_call.1} parent=63 // pred_fallthru
          _
        // Predicated region
        $region69: #{tpu_custom_call.1} parent=63 // pred_check
          %p1530 = pneg %p226
        $region70: #{tpu_custom_call.1} parent=63 // pred_check_branch
          %1532 = sbr.rel (%p1530) target = $region72
        $region71: #{tpu_custom_call.1} parent=63 // pred_region
          %s1533 = sand.u32 %s31, 1
          %s1534 = scalar_lea.sflag [#allocation5], %s1533
          %s1535 = sand.u32 %s211, 1
          %s1536 = smul.addr %s1535, 64
          %s1537 = scalar_lea.vmem [#allocation4], %s1536
          %1538 = dma.done %s1534, 1024
        $region72: #{tpu_custom_call.1} parent=63 // pred_fallthru
          _
        // Predicated region
        $region73: #{tpu_custom_call.1} parent=63 // pred_check
          %p1539 = pneg %p252
        $region74: #{tpu_custom_call.1} parent=63 // pred_check_branch
          %1541 = sbr.rel (%p1539) target = $region76
        $region75: #{tpu_custom_call.1} parent=63 // pred_region
          %s1542 = sand.u32 %s31, 1
          %s1543 = scalar_lea.sflag [#allocation5], %s1542
          %s1544 = sand.u32 %s237, 1
          %s1545 = smul.addr %s1544, 2
          %s1546 = scalar_lea.vmem [#allocation6], %s1545
          %1547 = dma.done %s1543, 32
        $region76: #{tpu_custom_call.1} parent=63 // pred_fallthru
          _
        // Predicated region
        $region77: #{tpu_custom_call.1} parent=63 // pred_check
          %p1548 = pneg %p278
        $region78: #{tpu_custom_call.1} parent=63 // pred_check_branch
          %1550 = sbr.rel (%p1548) target = $region80
        $region79: #{tpu_custom_call.1} parent=63 // pred_region
          %s1551 = sand.u32 %s263, 1
          %s1552 = scalar_lea.sflag [#allocation8], %s1551
          %s1553 = sand.u32 %s263, 1
          %s1554 = smul.addr %s1553, 2
          %s1555 = scalar_lea.vmem [#allocation7], %s1554
          %1556 = dma.done %s1552, 32
        $region80: #{tpu_custom_call.1} parent=63 // pred_fallthru
          _
      $region64: #{tpu_custom_call.1} parent=5 // pred_fallthru
        _
    $region6: #{tpu_custom_call.1} parent=1 // loop_footer
      %s29 = sadd.s32 1, %s25
    $region7: #{tpu_custom_call.1} parent=1 // loop_footer_branch
      %24 = sbr.rel target = $region3
    $region8: #{tpu_custom_call.1} parent=1 // loop_exit
      _
    %1557 = vsyncpa [#allocation3], 1
    %s1558 = scalar_lea.sflag [#allocation3], 1
    %1559 = vsyncpa %s1558, 1
    %1560 = vsyncpa [#allocation5], 1
    %s1561 = scalar_lea.sflag [#allocation5], 1
    %1562 = vsyncpa %s1561, 1
    %1563 = vsyncpa [#allocation8], 1
    %s1564 = scalar_lea.sflag [#allocation8], 1
    %1565 = vsyncpa %s1564, 1

</llo_original>
